<compile_context>
chip_gen: v5e
topology: v5e:2x2
jax: 0.10.0
libtpu: 0.0.40
codegen_flags: <defaults>
</compile_context>

<pallas_src>
import functools
import math

import jax
import jax.numpy as jnp
from jax.experimental import pallas as pl
from jax.experimental.pallas import tpu as pltpu


# ----------------------------------------------------------------------------
# Fused whole-model Pallas kernel (one grid step == one batch element)
# ----------------------------------------------------------------------------
def _fused_transformer_kernel(
    x_ref,                        # (L, D)            f32  embedded + pos-enc rows
    ln_emb_g_ref, ln_emb_b_ref,   # (1, D)            f32
    wqkv_ref, bqkv_ref,           # (nl, D, QW) bf16 / (nl, 1, QW) f32
    wo_ref, bo_ref,               # (nl, H*dv, D) bf16 / (nl, 1, D) f32
    ln1_g_ref, ln1_b_ref,         # (nl, 1, D)        f32
    w1_ref, b1_ref,               # (nl, D, d_inner) bf16 / (nl, 1, d_inner) f32
    w2_ref, b2_ref,               # (nl, d_inner, D) bf16 / (nl, 1, D) f32
    ln2_g_ref, ln2_b_ref,         # (nl, 1, D)        f32
    fc1_w_ref, fc1_b_ref,         # (D, n_word) bf16 / (1, n_word) f32
    logits_ref,                   # (L, n_word)       f32
    attn_ref,                     # (1, H, L, L)      f32  (last layer only)
    qkv_s,                        # VMEM (L, QW)      f32  scratch
    ctx_s,                        # VMEM (L, H*dv)    f32  scratch
    *, n_layer, H, dk, dv, scale, eps):
    L = x_ref.shape[0]

    def layer_norm(x, g, b):
        mu = jnp.mean(x, axis=-1, keepdims=True)
        var = jnp.mean(jnp.square(x - mu), axis=-1, keepdims=True)
        return (x - mu) * jax.lax.rsqrt(var + eps) * g + b

    def mm(a, w, bias=None, relu=False):
        # bf16 MXU inputs, f32 accumulation; epilogue stays f32 on the VPU.
        acc = jnp.dot(a.astype(w.dtype), w, preferred_element_type=jnp.float32)
        if bias is not None:
            acc = acc + bias
        if relu:
            acc = jnp.maximum(acc, 0.0)
        return acc

    # Causal (subsequent) mask generated in-kernel: no (L, L) HBM traffic.
    row = jax.lax.broadcasted_iota(jnp.int32, (L, L), 0)
    col = jax.lax.broadcasted_iota(jnp.int32, (L, L), 1)
    causal = row >= col

    # Embedding LayerNorm (the PyTorch module uses eps=1e-6).
    x = layer_norm(x_ref[...].astype(jnp.float32),
                   ln_emb_g_ref[...], ln_emb_b_ref[...])

    for li in range(n_layer):                               # static unroll
        # ---- multi-head causal self-attention (post-LN) --------------------
        residual = x
        qkv_s[...] = mm(x, wqkv_ref[li], bqkv_ref[li])       # fused Q|K|V
        for h in range(H):                                   # static unroll
            qh = qkv_s[:, h * dk:(h + 1) * dk] * scale       # scale folded in Q
            kh = qkv_s[:, H * dk + h * dk:H * dk + (h + 1) * dk]
            vh = qkv_s[:, 2 * H * dk + h * dv:2 * H * dk + (h + 1) * dv]
            s = jax.lax.dot_general(                         # Q @ K^T -> (L, L)
                qh.astype(jnp.bfloat16), kh.astype(jnp.bfloat16),
                (((1,), (1,)), ((), ())),
                preferred_element_type=jnp.float32)
            s = jnp.where(causal, s, jnp.float32(-1e9))
            m = jnp.max(s, axis=-1, keepdims=True)
            p = jnp.exp(s - m)                               # f32 softmax
            attn = p * pl.reciprocal(jnp.sum(p, axis=-1, keepdims=True),
                                     approx=True)
            ctx_s[:, h * dv:(h + 1) * dv] = jnp.dot(
                attn.astype(jnp.bfloat16), vh.astype(jnp.bfloat16),
                preferred_element_type=jnp.float32)
            if li == n_layer - 1:                            # last layer only
                attn_ref[0, h, :, :] = attn
        out = mm(ctx_s[...], wo_ref[li], bo_ref[li]) + residual
        out = layer_norm(out, ln1_g_ref[li], ln1_b_ref[li])

        # ---- position-wise FFN (fused w1 + ReLU + w2, post-LN) --------------
        hmid = mm(out, w1_ref[li], b1_ref[li], relu=True)
        ff = mm(hmid, w2_ref[li], b2_ref[li]) + out
        x = layer_norm(ff, ln2_g_ref[li], ln2_b_ref[li])

    # ---- output projection (weight_sharing == 0: independent Linear) --------
    logits_ref[...] = mm(x, fc1_w_ref[...], fc1_b_ref[...]).astype(
        logits_ref.dtype)


# ----------------------------------------------------------------------------
# Model glue (parameter init + forward orchestration)
# ----------------------------------------------------------------------------
class Config:
    n_layer = 2
    d_model = 32
    d_inner = 64
    n_head = 2
    d_k = 16
    d_v = 16
    n_word = 64
    n_gram = 8
    scaled_attn = True
    dropout = 0.1            # identity in eval mode
    weight_sharing = 0       # independent fc1 (Linear with bias)


def sinusoid_pos_table(n_position, d_model):
    pos = jnp.arange(n_position, dtype=jnp.float32)[:, None]
    i = jnp.arange(d_model, dtype=jnp.float32)[None, :]
    angle = pos / jnp.power(10000.0, 2.0 * jnp.floor(i / 2.0) / d_model)
    even = jnp.sin(angle)
    odd = jnp.cos(angle)
    table = jnp.where((jnp.arange(d_model) % 2 == 0)[None, :], even, odd)
    return table.astype(jnp.float32)    # (n_position, d_model)


def init_params(cfg, key):
    D, H, dk, dv = cfg.d_model, cfg.n_head, cfg.d_k, cfg.d_v
    n_layer, n_word, d_inner = cfg.n_layer, cfg.n_word, cfg.d_inner
    qkv_width = 2 * H * dk + H * dv
    ks = iter(jax.random.split(key, 16))

    def normal(shape, std=0.02, dtype=jnp.bfloat16):
        return (std * jax.random.normal(next(ks), shape, jnp.float32)).astype(dtype)

    return {
        # embedding stays f32 (gather + pos-enc add happen in XLA glue)
        "embedding": normal((n_word, D), dtype=jnp.float32),
        "ln_emb_g": jnp.ones((1, D), jnp.float32),
        "ln_emb_b": jnp.zeros((1, D), jnp.float32),
        # per-layer weights stacked along a leading layer axis; matmul weights
        # stored bf16 (MXU-native, halves DMA bytes), biases / LN params f32.
        "wqkv": normal((n_layer, D, qkv_width)),
        "bqkv": jnp.zeros((n_layer, 1, qkv_width), jnp.float32),
        "wo": normal((n_layer, H * dv, D)),
        "bo": jnp.zeros((n_layer, 1, D), jnp.float32),
        "ln1_g": jnp.ones((n_layer, 1, D), jnp.float32),
        "ln1_b": jnp.zeros((n_layer, 1, D), jnp.float32),
        "w1": normal((n_layer, D, d_inner)),
        "b1": jnp.zeros((n_layer, 1, d_inner), jnp.float32),
        "w2": normal((n_layer, d_inner, D)),
        "b2": jnp.zeros((n_layer, 1, D), jnp.float32),
        "ln2_g": jnp.ones((n_layer, 1, D), jnp.float32),
        "ln2_b": jnp.zeros((n_layer, 1, D), jnp.float32),
        "fc1_w": normal((D, n_word)),
        "fc1_b": jnp.zeros((1, n_word), jnp.float32),
    }


def transformer_forward(params, seq_batch, cfg):
    B, L = seq_batch.shape
    D, H, dk, dv = cfg.d_model, cfg.n_head, cfg.d_k, cfg.d_v
    n_layer, n_word, d_inner = cfg.n_layer, cfg.n_word, cfg.d_inner
    assert L % 8 == 0, "sequence length must be a multiple of the sublane tile (8)"
    qkv_width = 2 * H * dk + H * dv

    # embedding lookup + positional encoding: plain JAX glue (single gather)
    emb = jnp.take(params["embedding"], seq_batch, axis=0)        # (B, L, D)
    pos = sinusoid_pos_table(cfg.n_gram, D)[:L]                    # (L, D)
    x = (emb + pos[None, :, :]).reshape(B * L, D).astype(jnp.float32)
    # dropout1 = identity (eval mode)

    scale = (1.0 / math.sqrt(dk)) if cfg.scaled_attn else 1.0

    kernel = functools.partial(
        _fused_transformer_kernel,
        n_layer=n_layer, H=H, dk=dk, dv=dv, scale=scale, eps=1e-6)

    rep2 = lambda b: (0, 0)          # broadcast params: same block every step
    rep3 = lambda b: (0, 0, 0)

    logits, attn = pl.pallas_call(
        kernel,
        grid=(B,),
        out_shape=(
            jax.ShapeDtypeStruct((B * L, n_word), jnp.float32),
            jax.ShapeDtypeStruct((B, H, L, L), jnp.float32),
        ),
        in_specs=[
            pl.BlockSpec((L, D), lambda b: (b, 0)),               # x (per batch)
            pl.BlockSpec((1, D), rep2),                           # ln_emb_g
            pl.BlockSpec((1, D), rep2),                           # ln_emb_b
            pl.BlockSpec((n_layer, D, qkv_width), rep3),          # wqkv
            pl.BlockSpec((n_layer, 1, qkv_width), rep3),          # bqkv
            pl.BlockSpec((n_layer, H * dv, D), rep3),             # wo
            pl.BlockSpec((n_layer, 1, D), rep3),                  # bo
            pl.BlockSpec((n_layer, 1, D), rep3),                  # ln1_g
            pl.BlockSpec((n_layer, 1, D), rep3),                  # ln1_b
            pl.BlockSpec((n_layer, D, d_inner), rep3),            # w1
            pl.BlockSpec((n_layer, 1, d_inner), rep3),            # b1
            pl.BlockSpec((n_layer, d_inner, D), rep3),            # w2
            pl.BlockSpec((n_layer, 1, D), rep3),                  # b2
            pl.BlockSpec((n_layer, 1, D), rep3),                  # ln2_g
            pl.BlockSpec((n_layer, 1, D), rep3),                  # ln2_b
            pl.BlockSpec((D, n_word), rep2),                      # fc1_w
            pl.BlockSpec((1, n_word), rep2),                      # fc1_b
        ],
        out_specs=(
            pl.BlockSpec((L, n_word), lambda b: (b, 0)),          # logits
            pl.BlockSpec((1, H, L, L), lambda b: (b, 0, 0, 0)),   # last-layer attn
        ),
        scratch_shapes=[
            pltpu.VMEM((L, qkv_width), jnp.float32),              # fused QKV slab
            pltpu.VMEM((L, H * dv), jnp.float32),                 # merged heads ctx
        ],
        compiler_params=pltpu.CompilerParams(
            dimension_semantics=("parallel",)),                   # v7x: 2 TCs
    )(x,
      params["ln_emb_g"], params["ln_emb_b"],
      params["wqkv"], params["bqkv"],
      params["wo"], params["bo"],
      params["ln1_g"], params["ln1_b"],
      params["w1"], params["b1"],
      params["w2"], params["b2"],
      params["ln2_g"], params["ln2_b"],
      params["fc1_w"], params["fc1_b"])
    return logits, attn


# ----------------------------------------------------------------------------
if __name__ == "__main__":
    cfg = Config()
    key = jax.random.PRNGKey(0)
    pkey, dkey = jax.random.split(key)

    params = init_params(cfg, pkey)
    B = 2
    seq_batch = jax.random.randint(dkey, (B, cfg.n_gram), 0, cfg.n_word,
                                   dtype=jnp.int32)

    fwd = jax.jit(functools.partial(transformer_forward, cfg=cfg))
    logits, attn = fwd(params, seq_batch)
    jax.block_until_ready((logits, attn))

    assert logits.shape == (B * cfg.n_gram, cfg.n_word)
    assert attn.shape == (B, cfg.n_head, cfg.n_gram, cfg.n_gram)
    assert bool(jnp.all(jnp.isfinite(logits)))
    assert bool(jnp.all(jnp.isfinite(attn)))
    print("KERNEL_OK")
</pallas_src>

<mosaic_0001>
module attributes {stable_mosaic.version = 11 : i64} {
  func.func @_fused_transformer_kernel(%arg0: i32, %arg1: memref<8x32xf32, #tpu.memory_space<vmem>>, %arg2: memref<1x32xf32, #tpu.memory_space<vmem>>, %arg3: memref<1x32xf32, #tpu.memory_space<vmem>>, %arg4: memref<2x32x96xbf16, #tpu.memory_space<vmem>>, %arg5: memref<2x1x96xf32, #tpu.memory_space<vmem>>, %arg6: memref<2x32x32xbf16, #tpu.memory_space<vmem>>, %arg7: memref<2x1x32xf32, #tpu.memory_space<vmem>>, %arg8: memref<2x1x32xf32, #tpu.memory_space<vmem>>, %arg9: memref<2x1x32xf32, #tpu.memory_space<vmem>>, %arg10: memref<2x32x64xbf16, #tpu.memory_space<vmem>>, %arg11: memref<2x1x64xf32, #tpu.memory_space<vmem>>, %arg12: memref<2x64x32xbf16, #tpu.memory_space<vmem>>, %arg13: memref<2x1x32xf32, #tpu.memory_space<vmem>>, %arg14: memref<2x1x32xf32, #tpu.memory_space<vmem>>, %arg15: memref<2x1x32xf32, #tpu.memory_space<vmem>>, %arg16: memref<32x64xbf16, #tpu.memory_space<vmem>>, %arg17: memref<1x64xf32, #tpu.memory_space<vmem>>, %arg18: memref<8x64xf32, #tpu.memory_space<vmem>>, %arg19: memref<1x2x8x8xf32, #tpu.memory_space<vmem>>, %arg20: memref<8x96xf32, #tpu.memory_space<vmem>>, %arg21: memref<8x32xf32, #tpu.memory_space<vmem>>) attributes {dimension_semantics = [#tpu.dimension_semantics<parallel>], iteration_bounds = array<i64: 2>, scalar_prefetch = 0 : i64, scratch_operands = 2 : i64, tpu.core_type = #tpu.core_type<tc>, window_params = [{transform_indices = @transform_0, window_bounds = array<i64: 8, 32>}, {pipeline_mode = #tpu.pipeline_mode<synchronous>, transform_indices = @transform_1, window_bounds = array<i64: 1, 32>}, {pipeline_mode = #tpu.pipeline_mode<synchronous>, transform_indices = @transform_2, window_bounds = array<i64: 1, 32>}, {pipeline_mode = #tpu.pipeline_mode<synchronous>, transform_indices = @transform_3, window_bounds = array<i64: 2, 32, 96>}, {pipeline_mode = #tpu.pipeline_mode<synchronous>, transform_indices = @transform_4, window_bounds = array<i64: 2, 1, 96>}, {pipeline_mode = #tpu.pipeline_mode<synchronous>, transform_indices = @transform_5, window_bounds = array<i64: 2, 32, 32>}, {pipeline_mode = #tpu.pipeline_mode<synchronous>, transform_indices = @transform_6, window_bounds = array<i64: 2, 1, 32>}, {pipeline_mode = #tpu.pipeline_mode<synchronous>, transform_indices = @transform_7, window_bounds = array<i64: 2, 1, 32>}, {pipeline_mode = #tpu.pipeline_mode<synchronous>, transform_indices = @transform_8, window_bounds = array<i64: 2, 1, 32>}, {pipeline_mode = #tpu.pipeline_mode<synchronous>, transform_indices = @transform_9, window_bounds = array<i64: 2, 32, 64>}, {pipeline_mode = #tpu.pipeline_mode<synchronous>, transform_indices = @transform_10, window_bounds = array<i64: 2, 1, 64>}, {pipeline_mode = #tpu.pipeline_mode<synchronous>, transform_indices = @transform_11, window_bounds = array<i64: 2, 64, 32>}, {pipeline_mode = #tpu.pipeline_mode<synchronous>, transform_indices = @transform_12, window_bounds = array<i64: 2, 1, 32>}, {pipeline_mode = #tpu.pipeline_mode<synchronous>, transform_indices = @transform_13, window_bounds = array<i64: 2, 1, 32>}, {pipeline_mode = #tpu.pipeline_mode<synchronous>, transform_indices = @transform_14, window_bounds = array<i64: 2, 1, 32>}, {pipeline_mode = #tpu.pipeline_mode<synchronous>, transform_indices = @transform_15, window_bounds = array<i64: 32, 64>}, {pipeline_mode = #tpu.pipeline_mode<synchronous>, transform_indices = @transform_16, window_bounds = array<i64: 1, 64>}, {transform_indices = @transform_17, window_bounds = array<i64: 8, 64>}, {transform_indices = @transform_18, window_bounds = array<i64: 1, 2, 8, 8>}]} {
    %0 = tpu.iota {dimensions = array<i32: 0>} : vector<8x8xi32>
    %1 = tpu.iota {dimensions = array<i32: 1>} : vector<8x8xi32>
    %2 = arith.cmpi sge, %0, %1 : vector<8x8xi32>
    %c0 = arith.constant 0 : index
    %c0_0 = arith.constant 0 : index
    %3 = vector.load %arg1[%c0, %c0_0] : memref<8x32xf32, #tpu.memory_space<vmem>>, vector<8x32xf32>
    %c0_1 = arith.constant 0 : index
    %c0_2 = arith.constant 0 : index
    %4 = vector.load %arg2[%c0_1, %c0_2] : memref<1x32xf32, #tpu.memory_space<vmem>>, vector<1x32xf32>
    %c0_3 = arith.constant 0 : index
    %c0_4 = arith.constant 0 : index
    %5 = vector.load %arg3[%c0_3, %c0_4] : memref<1x32xf32, #tpu.memory_space<vmem>>, vector<1x32xf32>
    %cst = arith.constant dense<0.000000e+00> : vector<8xf32>
    %6 = vector.multi_reduction <add>, %3, %cst [1] : vector<8x32xf32> to vector<8xf32>
    %7 = vector.shape_cast %6 : vector<8xf32> to vector<8x1xf32>
    %cst_5 = arith.constant 3.200000e+01 : f32
    %8 = vector.broadcast %cst_5 : f32 to vector<8x1xf32>
    %9 = arith.divf %7, %8 : vector<8x1xf32>
    %10 = vector.broadcast %9 : vector<8x1xf32> to vector<8x32xf32>
    %11 = arith.subf %3, %10 : vector<8x32xf32>
    %12 = arith.mulf %11, %11 : vector<8x32xf32>
    %cst_6 = arith.constant dense<0.000000e+00> : vector<8xf32>
    %13 = vector.multi_reduction <add>, %12, %cst_6 [1] : vector<8x32xf32> to vector<8xf32>
    %14 = vector.shape_cast %13 : vector<8xf32> to vector<8x1xf32>
    %cst_7 = arith.constant 3.200000e+01 : f32
    %15 = vector.broadcast %cst_7 : f32 to vector<8x1xf32>
    %16 = arith.divf %14, %15 : vector<8x1xf32>
    %17 = vector.broadcast %9 : vector<8x1xf32> to vector<8x32xf32>
    %18 = arith.subf %3, %17 : vector<8x32xf32>
    %cst_8 = arith.constant 9.99999997E-7 : f32
    %19 = vector.broadcast %cst_8 : f32 to vector<8x1xf32>
    %20 = arith.addf %16, %19 : vector<8x1xf32>
    %21 = math.rsqrt %20 : vector<8x1xf32>
    %22 = vector.broadcast %21 : vector<8x1xf32> to vector<8x32xf32>
    %23 = arith.mulf %18, %22 : vector<8x32xf32>
    %24 = vector.broadcast %4 : vector<1x32xf32> to vector<8x32xf32>
    %25 = arith.mulf %23, %24 : vector<8x32xf32>
    %26 = vector.broadcast %5 : vector<1x32xf32> to vector<8x32xf32>
    %27 = arith.addf %25, %26 : vector<8x32xf32>
    %c0_9 = arith.constant 0 : index
    %c0_10 = arith.constant 0 : index
    %c0_11 = arith.constant 0 : index
    %28 = vector.load %arg4[%c0_9, %c0_10, %c0_11] : memref<2x32x96xbf16, #tpu.memory_space<vmem>>, vector<1x32x96xbf16>
    %29 = vector.shape_cast %28 : vector<1x32x96xbf16> to vector<32x96xbf16>
    %c0_12 = arith.constant 0 : index
    %c0_13 = arith.constant 0 : index
    %c0_14 = arith.constant 0 : index
    %30 = vector.load %arg5[%c0_12, %c0_13, %c0_14] : memref<2x1x96xf32, #tpu.memory_space<vmem>>, vector<1x1x96xf32>
    %31 = vector.shape_cast %30 : vector<1x1x96xf32> to vector<1x96xf32>
    %32 = arith.truncf %27 : vector<8x32xf32> to vector<8x32xbf16>
    %cst_15 = arith.constant dense<0.000000e+00> : vector<8x96xf32>
    %33 = tpu.matmul %32, %29, %cst_15 {dimension_numbers = #tpu.dot_dimension_numbers<[1], [0], [0], [1], [0, 0, 1, 1], [], []>} : vector<8x32xbf16>, vector<32x96xbf16>, vector<8x96xf32> -> vector<8x96xf32>
    %34 = vector.broadcast %31 : vector<1x96xf32> to vector<8x96xf32>
    %35 = arith.addf %33, %34 : vector<8x96xf32>
    %c0_16 = arith.constant 0 : index
    %c0_17 = arith.constant 0 : index
    %36 = vector.load %arg20[%c0_16, %c0_17] : memref<8x96xf32, #tpu.memory_space<vmem>>, vector<8x96xf32>
    tpu.vector_store %arg20[%c0_16, %c0_17], %35 {strides = array<i32>} : memref<8x96xf32, #tpu.memory_space<vmem>>, vector<8x96xf32>,
    %c0_18 = arith.constant 0 : index
    %c0_19 = arith.constant 0 : index
    %37 = vector.load %arg20[%c0_18, %c0_19] : memref<8x96xf32, #tpu.memory_space<vmem>>, vector<8x16xf32>
    %cst_20 = arith.constant 2.500000e-01 : f32
    %38 = vector.broadcast %cst_20 : f32 to vector<8x16xf32>
    %39 = arith.mulf %37, %38 : vector<8x16xf32>
    %c0_21 = arith.constant 0 : index
    %c32 = arith.constant 32 : index
    %40 = vector.load %arg20[%c0_21, %c32] : memref<8x96xf32, #tpu.memory_space<vmem>>, vector<8x16xf32>
    %c0_22 = arith.constant 0 : index
    %c64 = arith.constant 64 : index
    %41 = vector.load %arg20[%c0_22, %c64] : memref<8x96xf32, #tpu.memory_space<vmem>>, vector<8x16xf32>
    %42 = arith.truncf %39 : vector<8x16xf32> to vector<8x16xbf16>
    %43 = arith.truncf %40 : vector<8x16xf32> to vector<8x16xbf16>
    %cst_23 = arith.constant dense<0.000000e+00> : vector<8x8xf32>
    %44 = tpu.matmul %42, %43, %cst_23 {dimension_numbers = #tpu.dot_dimension_numbers<[1], [1], [0], [0], [0, 0, 1, 0], [], []>} : vector<8x16xbf16>, vector<8x16xbf16>, vector<8x8xf32> -> vector<8x8xf32>
    %cst_24 = arith.constant -1.000000e+09 : f32
    %45 = vector.broadcast %cst_24 : f32 to vector<8x8xf32>
    %46 = arith.select %2, %44, %45 : vector<8x8xi1>, vector<8x8xf32>
    %cst_25 = arith.constant dense<0xFF800000> : vector<8xf32>
    %47 = vector.multi_reduction <maximumf>, %46, %cst_25 [1] : vector<8x8xf32> to vector<8xf32>
    %48 = vector.shape_cast %47 : vector<8xf32> to vector<8x1xf32>
    %49 = vector.broadcast %48 : vector<8x1xf32> to vector<8x8xf32>
    %50 = arith.subf %46, %49 : vector<8x8xf32>
    %51 = math.exp %50 : vector<8x8xf32>
    %cst_26 = arith.constant dense<0.000000e+00> : vector<8xf32>
    %52 = vector.multi_reduction <add>, %51, %cst_26 [1] : vector<8x8xf32> to vector<8xf32>
    %53 = vector.shape_cast %52 : vector<8xf32> to vector<8x1xf32>
    %54 = tpu.reciprocal %53 {approx = true} : vector<8x1xf32> -> vector<8x1xf32>
    %55 = vector.broadcast %54 : vector<8x1xf32> to vector<8x8xf32>
    %56 = arith.mulf %51, %55 : vector<8x8xf32>
    %57 = arith.truncf %56 : vector<8x8xf32> to vector<8x8xbf16>
    %58 = arith.truncf %41 : vector<8x16xf32> to vector<8x16xbf16>
    %cst_27 = arith.constant dense<0.000000e+00> : vector<8x16xf32>
    %59 = tpu.matmul %57, %58, %cst_27 {dimension_numbers = #tpu.dot_dimension_numbers<[1], [0], [0], [1], [0, 0, 1, 1], [], []>} : vector<8x8xbf16>, vector<8x16xbf16>, vector<8x16xf32> -> vector<8x16xf32>
    %c0_28 = arith.constant 0 : index
    %c0_29 = arith.constant 0 : index
    %60 = vector.load %arg21[%c0_28, %c0_29] : memref<8x32xf32, #tpu.memory_space<vmem>>, vector<8x16xf32>
    tpu.vector_store %arg21[%c0_28, %c0_29], %59 {strides = array<i32>} : memref<8x32xf32, #tpu.memory_space<vmem>>, vector<8x16xf32>,
    %c0_30 = arith.constant 0 : index
    %c16 = arith.constant 16 : index
    %61 = vector.load %arg20[%c0_30, %c16] : memref<8x96xf32, #tpu.memory_space<vmem>>, vector<8x16xf32>
    %cst_31 = arith.constant 2.500000e-01 : f32
    %62 = vector.broadcast %cst_31 : f32 to vector<8x16xf32>
    %63 = arith.mulf %61, %62 : vector<8x16xf32>
    %c0_32 = arith.constant 0 : index
    %c48 = arith.constant 48 : index
    %64 = vector.load %arg20[%c0_32, %c48] : memref<8x96xf32, #tpu.memory_space<vmem>>, vector<8x16xf32>
    %c0_33 = arith.constant 0 : index
    %c80 = arith.constant 80 : index
    %65 = vector.load %arg20[%c0_33, %c80] : memref<8x96xf32, #tpu.memory_space<vmem>>, vector<8x16xf32>
    %66 = arith.truncf %63 : vector<8x16xf32> to vector<8x16xbf16>
    %67 = arith.truncf %64 : vector<8x16xf32> to vector<8x16xbf16>
    %cst_34 = arith.constant dense<0.000000e+00> : vector<8x8xf32>
    %68 = tpu.matmul %66, %67, %cst_34 {dimension_numbers = #tpu.dot_dimension_numbers<[1], [1], [0], [0], [0, 0, 1, 0], [], []>} : vector<8x16xbf16>, vector<8x16xbf16>, vector<8x8xf32> -> vector<8x8xf32>
    %cst_35 = arith.constant -1.000000e+09 : f32
    %69 = vector.broadcast %cst_35 : f32 to vector<8x8xf32>
    %70 = arith.select %2, %68, %69 : vector<8x8xi1>, vector<8x8xf32>
    %cst_36 = arith.constant dense<0xFF800000> : vector<8xf32>
    %71 = vector.multi_reduction <maximumf>, %70, %cst_36 [1] : vector<8x8xf32> to vector<8xf32>
    %72 = vector.shape_cast %71 : vector<8xf32> to vector<8x1xf32>
    %73 = vector.broadcast %72 : vector<8x1xf32> to vector<8x8xf32>
    %74 = arith.subf %70, %73 : vector<8x8xf32>
    %75 = math.exp %74 : vector<8x8xf32>
    %cst_37 = arith.constant dense<0.000000e+00> : vector<8xf32>
    %76 = vector.multi_reduction <add>, %75, %cst_37 [1] : vector<8x8xf32> to vector<8xf32>
    %77 = vector.shape_cast %76 : vector<8xf32> to vector<8x1xf32>
    %78 = tpu.reciprocal %77 {approx = true} : vector<8x1xf32> -> vector<8x1xf32>
    %79 = vector.broadcast %78 : vector<8x1xf32> to vector<8x8xf32>
    %80 = arith.mulf %75, %79 : vector<8x8xf32>
    %81 = arith.truncf %80 : vector<8x8xf32> to vector<8x8xbf16>
    %82 = arith.truncf %65 : vector<8x16xf32> to vector<8x16xbf16>
    %cst_38 = arith.constant dense<0.000000e+00> : vector<8x16xf32>
    %83 = tpu.matmul %81, %82, %cst_38 {dimension_numbers = #tpu.dot_dimension_numbers<[1], [0], [0], [1], [0, 0, 1, 1], [], []>} : vector<8x8xbf16>, vector<8x16xbf16>, vector<8x16xf32> -> vector<8x16xf32>
    %c0_39 = arith.constant 0 : index
    %c16_40 = arith.constant 16 : index
    %84 = vector.load %arg21[%c0_39, %c16_40] : memref<8x32xf32, #tpu.memory_space<vmem>>, vector<8x16xf32>
    tpu.vector_store %arg21[%c0_39, %c16_40], %83 {strides = array<i32>} : memref<8x32xf32, #tpu.memory_space<vmem>>, vector<8x16xf32>,
    %c0_41 = arith.constant 0 : index
    %c0_42 = arith.constant 0 : index
    %85 = vector.load %arg21[%c0_41, %c0_42] : memref<8x32xf32, #tpu.memory_space<vmem>>, vector<8x32xf32>
    %c0_43 = arith.constant 0 : index
    %c0_44 = arith.constant 0 : index
    %c0_45 = arith.constant 0 : index
    %86 = vector.load %arg6[%c0_43, %c0_44, %c0_45] : memref<2x32x32xbf16, #tpu.memory_space<vmem>>, vector<1x32x32xbf16>
    %87 = vector.shape_cast %86 : vector<1x32x32xbf16> to vector<32x32xbf16>
    %c0_46 = arith.constant 0 : index
    %c0_47 = arith.constant 0 : index
    %c0_48 = arith.constant 0 : index
    %88 = vector.load %arg7[%c0_46, %c0_47, %c0_48] : memref<2x1x32xf32, #tpu.memory_space<vmem>>, vector<1x1x32xf32>
    %89 = vector.shape_cast %88 : vector<1x1x32xf32> to vector<1x32xf32>
    %90 = arith.truncf %85 : vector<8x32xf32> to vector<8x32xbf16>
    %cst_49 = arith.constant dense<0.000000e+00> : vector<8x32xf32>
    %91 = tpu.matmul %90, %87, %cst_49 {dimension_numbers = #tpu.dot_dimension_numbers<[1], [0], [0], [1], [0, 0, 1, 1], [], []>} : vector<8x32xbf16>, vector<32x32xbf16>, vector<8x32xf32> -> vector<8x32xf32>
    %92 = vector.broadcast %89 : vector<1x32xf32> to vector<8x32xf32>
    %93 = arith.addf %91, %92 : vector<8x32xf32>
    %94 = arith.addf %93, %27 : vector<8x32xf32>
    %c0_50 = arith.constant 0 : index
    %c0_51 = arith.constant 0 : index
    %c0_52 = arith.constant 0 : index
    %95 = vector.load %arg8[%c0_50, %c0_51, %c0_52] : memref<2x1x32xf32, #tpu.memory_space<vmem>>, vector<1x1x32xf32>
    %96 = vector.shape_cast %95 : vector<1x1x32xf32> to vector<1x32xf32>
    %c0_53 = arith.constant 0 : index
    %c0_54 = arith.constant 0 : index
    %c0_55 = arith.constant 0 : index
    %97 = vector.load %arg9[%c0_53, %c0_54, %c0_55] : memref<2x1x32xf32, #tpu.memory_space<vmem>>, vector<1x1x32xf32>
    %98 = vector.shape_cast %97 : vector<1x1x32xf32> to vector<1x32xf32>
    %cst_56 = arith.constant dense<0.000000e+00> : vector<8xf32>
    %99 = vector.multi_reduction <add>, %94, %cst_56 [1] : vector<8x32xf32> to vector<8xf32>
    %100 = vector.shape_cast %99 : vector<8xf32> to vector<8x1xf32>
    %cst_57 = arith.constant 3.200000e+01 : f32
    %101 = vector.broadcast %cst_57 : f32 to vector<8x1xf32>
    %102 = arith.divf %100, %101 : vector<8x1xf32>
    %103 = vector.broadcast %102 : vector<8x1xf32> to vector<8x32xf32>
    %104 = arith.subf %94, %103 : vector<8x32xf32>
    %105 = arith.mulf %104, %104 : vector<8x32xf32>
    %cst_58 = arith.constant dense<0.000000e+00> : vector<8xf32>
    %106 = vector.multi_reduction <add>, %105, %cst_58 [1] : vector<8x32xf32> to vector<8xf32>
    %107 = vector.shape_cast %106 : vector<8xf32> to vector<8x1xf32>
    %cst_59 = arith.constant 3.200000e+01 : f32
    %108 = vector.broadcast %cst_59 : f32 to vector<8x1xf32>
    %109 = arith.divf %107, %108 : vector<8x1xf32>
    %110 = vector.broadcast %102 : vector<8x1xf32> to vector<8x32xf32>
    %111 = arith.subf %94, %110 : vector<8x32xf32>
    %cst_60 = arith.constant 9.99999997E-7 : f32
    %112 = vector.broadcast %cst_60 : f32 to vector<8x1xf32>
    %113 = arith.addf %109, %112 : vector<8x1xf32>
    %114 = math.rsqrt %113 : vector<8x1xf32>
    %115 = vector.broadcast %114 : vector<8x1xf32> to vector<8x32xf32>
    %116 = arith.mulf %111, %115 : vector<8x32xf32>
    %117 = vector.broadcast %96 : vector<1x32xf32> to vector<8x32xf32>
    %118 = arith.mulf %116, %117 : vector<8x32xf32>
    %119 = vector.broadcast %98 : vector<1x32xf32> to vector<8x32xf32>
    %120 = arith.addf %118, %119 : vector<8x32xf32>
    %c0_61 = arith.constant 0 : index
    %c0_62 = arith.constant 0 : index
    %c0_63 = arith.constant 0 : index
    %121 = vector.load %arg10[%c0_61, %c0_62, %c0_63] : memref<2x32x64xbf16, #tpu.memory_space<vmem>>, vector<1x32x64xbf16>
    %122 = vector.shape_cast %121 : vector<1x32x64xbf16> to vector<32x64xbf16>
    %c0_64 = arith.constant 0 : index
    %c0_65 = arith.constant 0 : index
    %c0_66 = arith.constant 0 : index
    %123 = vector.load %arg11[%c0_64, %c0_65, %c0_66] : memref<2x1x64xf32, #tpu.memory_space<vmem>>, vector<1x1x64xf32>
    %124 = vector.shape_cast %123 : vector<1x1x64xf32> to vector<1x64xf32>
    %125 = arith.truncf %120 : vector<8x32xf32> to vector<8x32xbf16>
    %cst_67 = arith.constant dense<0.000000e+00> : vector<8x64xf32>
    %126 = tpu.matmul %125, %122, %cst_67 {dimension_numbers = #tpu.dot_dimension_numbers<[1], [0], [0], [1], [0, 0, 1, 1], [], []>} : vector<8x32xbf16>, vector<32x64xbf16>, vector<8x64xf32> -> vector<8x64xf32>
    %127 = vector.broadcast %124 : vector<1x64xf32> to vector<8x64xf32>
    %128 = arith.addf %126, %127 : vector<8x64xf32>
    %cst_68 = arith.constant 0.000000e+00 : f32
    %129 = vector.broadcast %cst_68 : f32 to vector<8x64xf32>
    %130 = arith.maximumf %128, %129 : vector<8x64xf32>
    %c0_69 = arith.constant 0 : index
    %c0_70 = arith.constant 0 : index
    %c0_71 = arith.constant 0 : index
    %131 = vector.load %arg12[%c0_69, %c0_70, %c0_71] : memref<2x64x32xbf16, #tpu.memory_space<vmem>>, vector<1x64x32xbf16>
    %132 = vector.shape_cast %131 : vector<1x64x32xbf16> to vector<64x32xbf16>
    %c0_72 = arith.constant 0 : index
    %c0_73 = arith.constant 0 : index
    %c0_74 = arith.constant 0 : index
    %133 = vector.load %arg13[%c0_72, %c0_73, %c0_74] : memref<2x1x32xf32, #tpu.memory_space<vmem>>, vector<1x1x32xf32>
    %134 = vector.shape_cast %133 : vector<1x1x32xf32> to vector<1x32xf32>
    %135 = arith.truncf %130 : vector<8x64xf32> to vector<8x64xbf16>
    %cst_75 = arith.constant dense<0.000000e+00> : vector<8x32xf32>
    %136 = tpu.matmul %135, %132, %cst_75 {dimension_numbers = #tpu.dot_dimension_numbers<[1], [0], [0], [1], [0, 0, 1, 1], [], []>} : vector<8x64xbf16>, vector<64x32xbf16>, vector<8x32xf32> -> vector<8x32xf32>
    %137 = vector.broadcast %134 : vector<1x32xf32> to vector<8x32xf32>
    %138 = arith.addf %136, %137 : vector<8x32xf32>
    %139 = arith.addf %138, %120 : vector<8x32xf32>
    %c0_76 = arith.constant 0 : index
    %c0_77 = arith.constant 0 : index
    %c0_78 = arith.constant 0 : index
    %140 = vector.load %arg14[%c0_76, %c0_77, %c0_78] : memref<2x1x32xf32, #tpu.memory_space<vmem>>, vector<1x1x32xf32>
    %141 = vector.shape_cast %140 : vector<1x1x32xf32> to vector<1x32xf32>
    %c0_79 = arith.constant 0 : index
    %c0_80 = arith.constant 0 : index
    %c0_81 = arith.constant 0 : index
    %142 = vector.load %arg15[%c0_79, %c0_80, %c0_81] : memref<2x1x32xf32, #tpu.memory_space<vmem>>, vector<1x1x32xf32>
    %143 = vector.shape_cast %142 : vector<1x1x32xf32> to vector<1x32xf32>
    %cst_82 = arith.constant dense<0.000000e+00> : vector<8xf32>
    %144 = vector.multi_reduction <add>, %139, %cst_82 [1] : vector<8x32xf32> to vector<8xf32>
    %145 = vector.shape_cast %144 : vector<8xf32> to vector<8x1xf32>
    %cst_83 = arith.constant 3.200000e+01 : f32
    %146 = vector.broadcast %cst_83 : f32 to vector<8x1xf32>
    %147 = arith.divf %145, %146 : vector<8x1xf32>
    %148 = vector.broadcast %147 : vector<8x1xf32> to vector<8x32xf32>
    %149 = arith.subf %139, %148 : vector<8x32xf32>
    %150 = arith.mulf %149, %149 : vector<8x32xf32>
    %cst_84 = arith.constant dense<0.000000e+00> : vector<8xf32>
    %151 = vector.multi_reduction <add>, %150, %cst_84 [1] : vector<8x32xf32> to vector<8xf32>
    %152 = vector.shape_cast %151 : vector<8xf32> to vector<8x1xf32>
    %cst_85 = arith.constant 3.200000e+01 : f32
    %153 = vector.broadcast %cst_85 : f32 to vector<8x1xf32>
    %154 = arith.divf %152, %153 : vector<8x1xf32>
    %155 = vector.broadcast %147 : vector<8x1xf32> to vector<8x32xf32>
    %156 = arith.subf %139, %155 : vector<8x32xf32>
    %cst_86 = arith.constant 9.99999997E-7 : f32
    %157 = vector.broadcast %cst_86 : f32 to vector<8x1xf32>
    %158 = arith.addf %154, %157 : vector<8x1xf32>
    %159 = math.rsqrt %158 : vector<8x1xf32>
    %160 = vector.broadcast %159 : vector<8x1xf32> to vector<8x32xf32>
    %161 = arith.mulf %156, %160 : vector<8x32xf32>
    %162 = vector.broadcast %141 : vector<1x32xf32> to vector<8x32xf32>
    %163 = arith.mulf %161, %162 : vector<8x32xf32>
    %164 = vector.broadcast %143 : vector<1x32xf32> to vector<8x32xf32>
    %165 = arith.addf %163, %164 : vector<8x32xf32>
    %c1 = arith.constant 1 : index
    %c0_87 = arith.constant 0 : index
    %c0_88 = arith.constant 0 : index
    %166 = vector.load %arg4[%c1, %c0_87, %c0_88] : memref<2x32x96xbf16, #tpu.memory_space<vmem>>, vector<1x32x96xbf16>
    %167 = vector.shape_cast %166 : vector<1x32x96xbf16> to vector<32x96xbf16>
    %c1_89 = arith.constant 1 : index
    %c0_90 = arith.constant 0 : index
    %c0_91 = arith.constant 0 : index
    %168 = vector.load %arg5[%c1_89, %c0_90, %c0_91] : memref<2x1x96xf32, #tpu.memory_space<vmem>>, vector<1x1x96xf32>
    %169 = vector.shape_cast %168 : vector<1x1x96xf32> to vector<1x96xf32>
    %170 = arith.truncf %165 : vector<8x32xf32> to vector<8x32xbf16>
    %cst_92 = arith.constant dense<0.000000e+00> : vector<8x96xf32>
    %171 = tpu.matmul %170, %167, %cst_92 {dimension_numbers = #tpu.dot_dimension_numbers<[1], [0], [0], [1], [0, 0, 1, 1], [], []>} : vector<8x32xbf16>, vector<32x96xbf16>, vector<8x96xf32> -> vector<8x96xf32>
    %172 = vector.broadcast %169 : vector<1x96xf32> to vector<8x96xf32>
    %173 = arith.addf %171, %172 : vector<8x96xf32>
    %c0_93 = arith.constant 0 : index
    %c0_94 = arith.constant 0 : index
    %174 = vector.load %arg20[%c0_93, %c0_94] : memref<8x96xf32, #tpu.memory_space<vmem>>, vector<8x96xf32>
    tpu.vector_store %arg20[%c0_93, %c0_94], %173 {strides = array<i32>} : memref<8x96xf32, #tpu.memory_space<vmem>>, vector<8x96xf32>,
    %c0_95 = arith.constant 0 : index
    %c0_96 = arith.constant 0 : index
    %175 = vector.load %arg20[%c0_95, %c0_96] : memref<8x96xf32, #tpu.memory_space<vmem>>, vector<8x16xf32>
    %cst_97 = arith.constant 2.500000e-01 : f32
    %176 = vector.broadcast %cst_97 : f32 to vector<8x16xf32>
    %177 = arith.mulf %175, %176 : vector<8x16xf32>
    %c0_98 = arith.constant 0 : index
    %c32_99 = arith.constant 32 : index
    %178 = vector.load %arg20[%c0_98, %c32_99] : memref<8x96xf32, #tpu.memory_space<vmem>>, vector<8x16xf32>
    %c0_100 = arith.constant 0 : index
    %c64_101 = arith.constant 64 : index
    %179 = vector.load %arg20[%c0_100, %c64_101] : memref<8x96xf32, #tpu.memory_space<vmem>>, vector<8x16xf32>
    %180 = arith.truncf %177 : vector<8x16xf32> to vector<8x16xbf16>
    %181 = arith.truncf %178 : vector<8x16xf32> to vector<8x16xbf16>
    %cst_102 = arith.constant dense<0.000000e+00> : vector<8x8xf32>
    %182 = tpu.matmul %180, %181, %cst_102 {dimension_numbers = #tpu.dot_dimension_numbers<[1], [1], [0], [0], [0, 0, 1, 0], [], []>} : vector<8x16xbf16>, vector<8x16xbf16>, vector<8x8xf32> -> vector<8x8xf32>
    %cst_103 = arith.constant -1.000000e+09 : f32
    %183 = vector.broadcast %cst_103 : f32 to vector<8x8xf32>
    %184 = arith.select %2, %182, %183 : vector<8x8xi1>, vector<8x8xf32>
    %cst_104 = arith.constant dense<0xFF800000> : vector<8xf32>
    %185 = vector.multi_reduction <maximumf>, %184, %cst_104 [1] : vector<8x8xf32> to vector<8xf32>
    %186 = vector.shape_cast %185 : vector<8xf32> to vector<8x1xf32>
    %187 = vector.broadcast %186 : vector<8x1xf32> to vector<8x8xf32>
    %188 = arith.subf %184, %187 : vector<8x8xf32>
    %189 = math.exp %188 : vector<8x8xf32>
    %cst_105 = arith.constant dense<0.000000e+00> : vector<8xf32>
    %190 = vector.multi_reduction <add>, %189, %cst_105 [1] : vector<8x8xf32> to vector<8xf32>
    %191 = vector.shape_cast %190 : vector<8xf32> to vector<8x1xf32>
    %192 = tpu.reciprocal %191 {approx = true} : vector<8x1xf32> -> vector<8x1xf32>
    %193 = vector.broadcast %192 : vector<8x1xf32> to vector<8x8xf32>
    %194 = arith.mulf %189, %193 : vector<8x8xf32>
    %195 = arith.truncf %194 : vector<8x8xf32> to vector<8x8xbf16>
    %196 = arith.truncf %179 : vector<8x16xf32> to vector<8x16xbf16>
    %cst_106 = arith.constant dense<0.000000e+00> : vector<8x16xf32>
    %197 = tpu.matmul %195, %196, %cst_106 {dimension_numbers = #tpu.dot_dimension_numbers<[1], [0], [0], [1], [0, 0, 1, 1], [], []>} : vector<8x8xbf16>, vector<8x16xbf16>, vector<8x16xf32> -> vector<8x16xf32>
    %c0_107 = arith.constant 0 : index
    %c0_108 = arith.constant 0 : index
    %198 = vector.load %arg21[%c0_107, %c0_108] : memref<8x32xf32, #tpu.memory_space<vmem>>, vector<8x16xf32>
    tpu.vector_store %arg21[%c0_107, %c0_108], %197 {strides = array<i32>} : memref<8x32xf32, #tpu.memory_space<vmem>>, vector<8x16xf32>,
    %c0_109 = arith.constant 0 : index
    %c0_110 = arith.constant 0 : index
    %c0_111 = arith.constant 0 : index
    %c0_112 = arith.constant 0 : index
    %199 = vector.load %arg19[%c0_109, %c0_110, %c0_111, %c0_112] : memref<1x2x8x8xf32, #tpu.memory_space<vmem>>, vector<1x1x8x8xf32>
    %200 = vector.shape_cast %199 : vector<1x1x8x8xf32> to vector<8x8xf32>
    %201 = vector.shape_cast %194 : vector<8x8xf32> to vector<1x1x8x8xf32>
    tpu.vector_store %arg19[%c0_109, %c0_110, %c0_111, %c0_112], %201 {strides = array<i32>} : memref<1x2x8x8xf32, #tpu.memory_space<vmem>>, vector<1x1x8x8xf32>,
    %c0_113 = arith.constant 0 : index
    %c16_114 = arith.constant 16 : index
    %202 = vector.load %arg20[%c0_113, %c16_114] : memref<8x96xf32, #tpu.memory_space<vmem>>, vector<8x16xf32>
    %cst_115 = arith.constant 2.500000e-01 : f32
    %203 = vector.broadcast %cst_115 : f32 to vector<8x16xf32>
    %204 = arith.mulf %202, %203 : vector<8x16xf32>
    %c0_116 = arith.constant 0 : index
    %c48_117 = arith.constant 48 : index
    %205 = vector.load %arg20[%c0_116, %c48_117] : memref<8x96xf32, #tpu.memory_space<vmem>>, vector<8x16xf32>
    %c0_118 = arith.constant 0 : index
    %c80_119 = arith.constant 80 : index
    %206 = vector.load %arg20[%c0_118, %c80_119] : memref<8x96xf32, #tpu.memory_space<vmem>>, vector<8x16xf32>
    %207 = arith.truncf %204 : vector<8x16xf32> to vector<8x16xbf16>
    %208 = arith.truncf %205 : vector<8x16xf32> to vector<8x16xbf16>
    %cst_120 = arith.constant dense<0.000000e+00> : vector<8x8xf32>
    %209 = tpu.matmul %207, %208, %cst_120 {dimension_numbers = #tpu.dot_dimension_numbers<[1], [1], [0], [0], [0, 0, 1, 0], [], []>} : vector<8x16xbf16>, vector<8x16xbf16>, vector<8x8xf32> -> vector<8x8xf32>
    %cst_121 = arith.constant -1.000000e+09 : f32
    %210 = vector.broadcast %cst_121 : f32 to vector<8x8xf32>
    %211 = arith.select %2, %209, %210 : vector<8x8xi1>, vector<8x8xf32>
    %cst_122 = arith.constant dense<0xFF800000> : vector<8xf32>
    %212 = vector.multi_reduction <maximumf>, %211, %cst_122 [1] : vector<8x8xf32> to vector<8xf32>
    %213 = vector.shape_cast %212 : vector<8xf32> to vector<8x1xf32>
    %214 = vector.broadcast %213 : vector<8x1xf32> to vector<8x8xf32>
    %215 = arith.subf %211, %214 : vector<8x8xf32>
    %216 = math.exp %215 : vector<8x8xf32>
    %cst_123 = arith.constant dense<0.000000e+00> : vector<8xf32>
    %217 = vector.multi_reduction <add>, %216, %cst_123 [1] : vector<8x8xf32> to vector<8xf32>
    %218 = vector.shape_cast %217 : vector<8xf32> to vector<8x1xf32>
    %219 = tpu.reciprocal %218 {approx = true} : vector<8x1xf32> -> vector<8x1xf32>
    %220 = vector.broadcast %219 : vector<8x1xf32> to vector<8x8xf32>
    %221 = arith.mulf %216, %220 : vector<8x8xf32>
    %222 = arith.truncf %221 : vector<8x8xf32> to vector<8x8xbf16>
    %223 = arith.truncf %206 : vector<8x16xf32> to vector<8x16xbf16>
    %cst_124 = arith.constant dense<0.000000e+00> : vector<8x16xf32>
    %224 = tpu.matmul %222, %223, %cst_124 {dimension_numbers = #tpu.dot_dimension_numbers<[1], [0], [0], [1], [0, 0, 1, 1], [], []>} : vector<8x8xbf16>, vector<8x16xbf16>, vector<8x16xf32> -> vector<8x16xf32>
    %c0_125 = arith.constant 0 : index
    %c16_126 = arith.constant 16 : index
    %225 = vector.load %arg21[%c0_125, %c16_126] : memref<8x32xf32, #tpu.memory_space<vmem>>, vector<8x16xf32>
    tpu.vector_store %arg21[%c0_125, %c16_126], %224 {strides = array<i32>} : memref<8x32xf32, #tpu.memory_space<vmem>>, vector<8x16xf32>,
    %c0_127 = arith.constant 0 : index
    %c1_128 = arith.constant 1 : index
    %c0_129 = arith.constant 0 : index
    %c0_130 = arith.constant 0 : index
    %226 = vector.load %arg19[%c0_127, %c1_128, %c0_129, %c0_130] : memref<1x2x8x8xf32, #tpu.memory_space<vmem>>, vector<1x1x8x8xf32>
    %227 = vector.shape_cast %226 : vector<1x1x8x8xf32> to vector<8x8xf32>
    %228 = vector.shape_cast %221 : vector<8x8xf32> to vector<1x1x8x8xf32>
    tpu.vector_store %arg19[%c0_127, %c1_128, %c0_129, %c0_130], %228 {strides = array<i32>} : memref<1x2x8x8xf32, #tpu.memory_space<vmem>>, vector<1x1x8x8xf32>,
    %c0_131 = arith.constant 0 : index
    %c0_132 = arith.constant 0 : index
    %229 = vector.load %arg21[%c0_131, %c0_132] : memref<8x32xf32, #tpu.memory_space<vmem>>, vector<8x32xf32>
    %c1_133 = arith.constant 1 : index
    %c0_134 = arith.constant 0 : index
    %c0_135 = arith.constant 0 : index
    %230 = vector.load %arg6[%c1_133, %c0_134, %c0_135] : memref<2x32x32xbf16, #tpu.memory_space<vmem>>, vector<1x32x32xbf16>
    %231 = vector.shape_cast %230 : vector<1x32x32xbf16> to vector<32x32xbf16>
    %c1_136 = arith.constant 1 : index
    %c0_137 = arith.constant 0 : index
    %c0_138 = arith.constant 0 : index
    %232 = vector.load %arg7[%c1_136, %c0_137, %c0_138] : memref<2x1x32xf32, #tpu.memory_space<vmem>>, vector<1x1x32xf32>
    %233 = vector.shape_cast %232 : vector<1x1x32xf32> to vector<1x32xf32>
    %234 = arith.truncf %229 : vector<8x32xf32> to vector<8x32xbf16>
    %cst_139 = arith.constant dense<0.000000e+00> : vector<8x32xf32>
    %235 = tpu.matmul %234, %231, %cst_139 {dimension_numbers = #tpu.dot_dimension_numbers<[1], [0], [0], [1], [0, 0, 1, 1], [], []>} : vector<8x32xbf16>, vector<32x32xbf16>, vector<8x32xf32> -> vector<8x32xf32>
    %236 = vector.broadcast %233 : vector<1x32xf32> to vector<8x32xf32>
    %237 = arith.addf %235, %236 : vector<8x32xf32>
    %238 = arith.addf %237, %165 : vector<8x32xf32>
    %c1_140 = arith.constant 1 : index
    %c0_141 = arith.constant 0 : index
    %c0_142 = arith.constant 0 : index
    %239 = vector.load %arg8[%c1_140, %c0_141, %c0_142] : memref<2x1x32xf32, #tpu.memory_space<vmem>>, vector<1x1x32xf32>
    %240 = vector.shape_cast %239 : vector<1x1x32xf32> to vector<1x32xf32>
    %c1_143 = arith.constant 1 : index
    %c0_144 = arith.constant 0 : index
    %c0_145 = arith.constant 0 : index
    %241 = vector.load %arg9[%c1_143, %c0_144, %c0_145] : memref<2x1x32xf32, #tpu.memory_space<vmem>>, vector<1x1x32xf32>
    %242 = vector.shape_cast %241 : vector<1x1x32xf32> to vector<1x32xf32>
    %cst_146 = arith.constant dense<0.000000e+00> : vector<8xf32>
    %243 = vector.multi_reduction <add>, %238, %cst_146 [1] : vector<8x32xf32> to vector<8xf32>
    %244 = vector.shape_cast %243 : vector<8xf32> to vector<8x1xf32>
    %cst_147 = arith.constant 3.200000e+01 : f32
    %245 = vector.broadcast %cst_147 : f32 to vector<8x1xf32>
    %246 = arith.divf %244, %245 : vector<8x1xf32>
    %247 = vector.broadcast %246 : vector<8x1xf32> to vector<8x32xf32>
    %248 = arith.subf %238, %247 : vector<8x32xf32>
    %249 = arith.mulf %248, %248 : vector<8x32xf32>
    %cst_148 = arith.constant dense<0.000000e+00> : vector<8xf32>
    %250 = vector.multi_reduction <add>, %249, %cst_148 [1] : vector<8x32xf32> to vector<8xf32>
    %251 = vector.shape_cast %250 : vector<8xf32> to vector<8x1xf32>
    %cst_149 = arith.constant 3.200000e+01 : f32
    %252 = vector.broadcast %cst_149 : f32 to vector<8x1xf32>
    %253 = arith.divf %251, %252 : vector<8x1xf32>
    %254 = vector.broadcast %246 : vector<8x1xf32> to vector<8x32xf32>
    %255 = arith.subf %238, %254 : vector<8x32xf32>
    %cst_150 = arith.constant 9.99999997E-7 : f32
    %256 = vector.broadcast %cst_150 : f32 to vector<8x1xf32>
    %257 = arith.addf %253, %256 : vector<8x1xf32>
    %258 = math.rsqrt %257 : vector<8x1xf32>
    %259 = vector.broadcast %258 : vector<8x1xf32> to vector<8x32xf32>
    %260 = arith.mulf %255, %259 : vector<8x32xf32>
    %261 = vector.broadcast %240 : vector<1x32xf32> to vector<8x32xf32>
    %262 = arith.mulf %260, %261 : vector<8x32xf32>
    %263 = vector.broadcast %242 : vector<1x32xf32> to vector<8x32xf32>
    %264 = arith.addf %262, %263 : vector<8x32xf32>
    %c1_151 = arith.constant 1 : index
    %c0_152 = arith.constant 0 : index
    %c0_153 = arith.constant 0 : index
    %265 = vector.load %arg10[%c1_151, %c0_152, %c0_153] : memref<2x32x64xbf16, #tpu.memory_space<vmem>>, vector<1x32x64xbf16>
    %266 = vector.shape_cast %265 : vector<1x32x64xbf16> to vector<32x64xbf16>
    %c1_154 = arith.constant 1 : index
    %c0_155 = arith.constant 0 : index
    %c0_156 = arith.constant 0 : index
    %267 = vector.load %arg11[%c1_154, %c0_155, %c0_156] : memref<2x1x64xf32, #tpu.memory_space<vmem>>, vector<1x1x64xf32>
    %268 = vector.shape_cast %267 : vector<1x1x64xf32> to vector<1x64xf32>
    %269 = arith.truncf %264 : vector<8x32xf32> to vector<8x32xbf16>
    %cst_157 = arith.constant dense<0.000000e+00> : vector<8x64xf32>
    %270 = tpu.matmul %269, %266, %cst_157 {dimension_numbers = #tpu.dot_dimension_numbers<[1], [0], [0], [1], [0, 0, 1, 1], [], []>} : vector<8x32xbf16>, vector<32x64xbf16>, vector<8x64xf32> -> vector<8x64xf32>
    %271 = vector.broadcast %268 : vector<1x64xf32> to vector<8x64xf32>
    %272 = arith.addf %270, %271 : vector<8x64xf32>
    %cst_158 = arith.constant 0.000000e+00 : f32
    %273 = vector.broadcast %cst_158 : f32 to vector<8x64xf32>
    %274 = arith.maximumf %272, %273 : vector<8x64xf32>
    %c1_159 = arith.constant 1 : index
    %c0_160 = arith.constant 0 : index
    %c0_161 = arith.constant 0 : index
    %275 = vector.load %arg12[%c1_159, %c0_160, %c0_161] : memref<2x64x32xbf16, #tpu.memory_space<vmem>>, vector<1x64x32xbf16>
    %276 = vector.shape_cast %275 : vector<1x64x32xbf16> to vector<64x32xbf16>
    %c1_162 = arith.constant 1 : index
    %c0_163 = arith.constant 0 : index
    %c0_164 = arith.constant 0 : index
    %277 = vector.load %arg13[%c1_162, %c0_163, %c0_164] : memref<2x1x32xf32, #tpu.memory_space<vmem>>, vector<1x1x32xf32>
    %278 = vector.shape_cast %277 : vector<1x1x32xf32> to vector<1x32xf32>
    %279 = arith.truncf %274 : vector<8x64xf32> to vector<8x64xbf16>
    %cst_165 = arith.constant dense<0.000000e+00> : vector<8x32xf32>
    %280 = tpu.matmul %279, %276, %cst_165 {dimension_numbers = #tpu.dot_dimension_numbers<[1], [0], [0], [1], [0, 0, 1, 1], [], []>} : vector<8x64xbf16>, vector<64x32xbf16>, vector<8x32xf32> -> vector<8x32xf32>
    %281 = vector.broadcast %278 : vector<1x32xf32> to vector<8x32xf32>
    %282 = arith.addf %280, %281 : vector<8x32xf32>
    %283 = arith.addf %282, %264 : vector<8x32xf32>
    %c1_166 = arith.constant 1 : index
    %c0_167 = arith.constant 0 : index
    %c0_168 = arith.constant 0 : index
    %284 = vector.load %arg14[%c1_166, %c0_167, %c0_168] : memref<2x1x32xf32, #tpu.memory_space<vmem>>, vector<1x1x32xf32>
    %285 = vector.shape_cast %284 : vector<1x1x32xf32> to vector<1x32xf32>
    %c1_169 = arith.constant 1 : index
    %c0_170 = arith.constant 0 : index
    %c0_171 = arith.constant 0 : index
    %286 = vector.load %arg15[%c1_169, %c0_170, %c0_171] : memref<2x1x32xf32, #tpu.memory_space<vmem>>, vector<1x1x32xf32>
    %287 = vector.shape_cast %286 : vector<1x1x32xf32> to vector<1x32xf32>
    %cst_172 = arith.constant dense<0.000000e+00> : vector<8xf32>
    %288 = vector.multi_reduction <add>, %283, %cst_172 [1] : vector<8x32xf32> to vector<8xf32>
    %289 = vector.shape_cast %288 : vector<8xf32> to vector<8x1xf32>
    %cst_173 = arith.constant 3.200000e+01 : f32
    %290 = vector.broadcast %cst_173 : f32 to vector<8x1xf32>
    %291 = arith.divf %289, %290 : vector<8x1xf32>
    %292 = vector.broadcast %291 : vector<8x1xf32> to vector<8x32xf32>
    %293 = arith.subf %283, %292 : vector<8x32xf32>
    %294 = arith.mulf %293, %293 : vector<8x32xf32>
    %cst_174 = arith.constant dense<0.000000e+00> : vector<8xf32>
    %295 = vector.multi_reduction <add>, %294, %cst_174 [1] : vector<8x32xf32> to vector<8xf32>
    %296 = vector.shape_cast %295 : vector<8xf32> to vector<8x1xf32>
    %cst_175 = arith.constant 3.200000e+01 : f32
    %297 = vector.broadcast %cst_175 : f32 to vector<8x1xf32>
    %298 = arith.divf %296, %297 : vector<8x1xf32>
    %299 = vector.broadcast %291 : vector<8x1xf32> to vector<8x32xf32>
    %300 = arith.subf %283, %299 : vector<8x32xf32>
    %cst_176 = arith.constant 9.99999997E-7 : f32
    %301 = vector.broadcast %cst_176 : f32 to vector<8x1xf32>
    %302 = arith.addf %298, %301 : vector<8x1xf32>
    %303 = math.rsqrt %302 : vector<8x1xf32>
    %304 = vector.broadcast %303 : vector<8x1xf32> to vector<8x32xf32>
    %305 = arith.mulf %300, %304 : vector<8x32xf32>
    %306 = vector.broadcast %285 : vector<1x32xf32> to vector<8x32xf32>
    %307 = arith.mulf %305, %306 : vector<8x32xf32>
    %308 = vector.broadcast %287 : vector<1x32xf32> to vector<8x32xf32>
    %309 = arith.addf %307, %308 : vector<8x32xf32>
    %c0_177 = arith.constant 0 : index
    %c0_178 = arith.constant 0 : index
    %310 = vector.load %arg16[%c0_177, %c0_178] : memref<32x64xbf16, #tpu.memory_space<vmem>>, vector<32x64xbf16>
    %c0_179 = arith.constant 0 : index
    %c0_180 = arith.constant 0 : index
    %311 = vector.load %arg17[%c0_179, %c0_180] : memref<1x64xf32, #tpu.memory_space<vmem>>, vector<1x64xf32>
    %312 = arith.truncf %309 : vector<8x32xf32> to vector<8x32xbf16>
    %cst_181 = arith.constant dense<0.000000e+00> : vector<8x64xf32>
    %313 = tpu.matmul %312, %310, %cst_181 {dimension_numbers = #tpu.dot_dimension_numbers<[1], [0], [0], [1], [0, 0, 1, 1], [], []>} : vector<8x32xbf16>, vector<32x64xbf16>, vector<8x64xf32> -> vector<8x64xf32>
    %314 = vector.broadcast %311 : vector<1x64xf32> to vector<8x64xf32>
    %315 = arith.addf %313, %314 : vector<8x64xf32>
    %c0_182 = arith.constant 0 : index
    %c0_183 = arith.constant 0 : index
    %316 = vector.load %arg18[%c0_182, %c0_183] : memref<8x64xf32, #tpu.memory_space<vmem>>, vector<8x64xf32>
    tpu.vector_store %arg18[%c0_182, %c0_183], %315 {strides = array<i32>} : memref<8x64xf32, #tpu.memory_space<vmem>>, vector<8x64xf32>,
    return
  }
  func.func @transform_0(%arg0: i32) -> (i32, i32) {
    %c0_i32 = arith.constant 0 : i32
    %c0_i32_0 = arith.constant 0 : i32
    return %arg0, %c0_i32 : i32, i32
  }
  func.func @transform_1(%arg0: i32) -> (i32, i32) {
    %c0_i32 = arith.constant 0 : i32
    %c0_i32_0 = arith.constant 0 : i32
    %c0_i32_1 = arith.constant 0 : i32
    return %c0_i32, %c0_i32_0 : i32, i32
  }
  func.func @transform_2(%arg0: i32) -> (i32, i32) {
    %c0_i32 = arith.constant 0 : i32
    %c0_i32_0 = arith.constant 0 : i32
    %c0_i32_1 = arith.constant 0 : i32
    return %c0_i32, %c0_i32_0 : i32, i32
  }
  func.func @transform_3(%arg0: i32) -> (i32, i32, i32) {
    %c0_i32 = arith.constant 0 : i32
    %c0_i32_0 = arith.constant 0 : i32
    %c0_i32_1 = arith.constant 0 : i32
    %c0_i32_2 = arith.constant 0 : i32
    return %c0_i32, %c0_i32_0, %c0_i32_1 : i32, i32, i32
  }
  func.func @transform_4(%arg0: i32) -> (i32, i32, i32) {
    %c0_i32 = arith.constant 0 : i32
    %c0_i32_0 = arith.constant 0 : i32
    %c0_i32_1 = arith.constant 0 : i32
    %c0_i32_2 = arith.constant 0 : i32
    return %c0_i32, %c0_i32_0, %c0_i32_1 : i32, i32, i32
  }
  func.func @transform_5(%arg0: i32) -> (i32, i32, i32) {
    %c0_i32 = arith.constant 0 : i32
    %c0_i32_0 = arith.constant 0 : i32
    %c0_i32_1 = arith.constant 0 : i32
    %c0_i32_2 = arith.constant 0 : i32
    return %c0_i32, %c0_i32_0, %c0_i32_1 : i32, i32, i32
  }
  func.func @transform_6(%arg0: i32) -> (i32, i32, i32) {
    %c0_i32 = arith.constant 0 : i32
    %c0_i32_0 = arith.constant 0 : i32
    %c0_i32_1 = arith.constant 0 : i32
    %c0_i32_2 = arith.constant 0 : i32
    return %c0_i32, %c0_i32_0, %c0_i32_1 : i32, i32, i32
  }
  func.func @transform_7(%arg0: i32) -> (i32, i32, i32) {
    %c0_i32 = arith.constant 0 : i32
    %c0_i32_0 = arith.constant 0 : i32
    %c0_i32_1 = arith.constant 0 : i32
    %c0_i32_2 = arith.constant 0 : i32
    return %c0_i32, %c0_i32_0, %c0_i32_1 : i32, i32, i32
  }
  func.func @transform_8(%arg0: i32) -> (i32, i32, i32) {
    %c0_i32 = arith.constant 0 : i32
    %c0_i32_0 = arith.constant 0 : i32
    %c0_i32_1 = arith.constant 0 : i32
    %c0_i32_2 = arith.constant 0 : i32
    return %c0_i32, %c0_i32_0, %c0_i32_1 : i32, i32, i32
  }
  func.func @transform_9(%arg0: i32) -> (i32, i32, i32) {
    %c0_i32 = arith.constant 0 : i32
    %c0_i32_0 = arith.constant 0 : i32
    %c0_i32_1 = arith.constant 0 : i32
    %c0_i32_2 = arith.constant 0 : i32
    return %c0_i32, %c0_i32_0, %c0_i32_1 : i32, i32, i32
  }
  func.func @transform_10(%arg0: i32) -> (i32, i32, i32) {
    %c0_i32 = arith.constant 0 : i32
    %c0_i32_0 = arith.constant 0 : i32
    %c0_i32_1 = arith.constant 0 : i32
    %c0_i32_2 = arith.constant 0 : i32
    return %c0_i32, %c0_i32_0, %c0_i32_1 : i32, i32, i32
  }
  func.func @transform_11(%arg0: i32) -> (i32, i32, i32) {
    %c0_i32 = arith.constant 0 : i32
    %c0_i32_0 = arith.constant 0 : i32
    %c0_i32_1 = arith.constant 0 : i32
    %c0_i32_2 = arith.constant 0 : i32
    return %c0_i32, %c0_i32_0, %c0_i32_1 : i32, i32, i32
  }
  func.func @transform_12(%arg0: i32) -> (i32, i32, i32) {
    %c0_i32 = arith.constant 0 : i32
    %c0_i32_0 = arith.constant 0 : i32
    %c0_i32_1 = arith.constant 0 : i32
    %c0_i32_2 = arith.constant 0 : i32
    return %c0_i32, %c0_i32_0, %c0_i32_1 : i32, i32, i32
  }
  func.func @transform_13(%arg0: i32) -> (i32, i32, i32) {
    %c0_i32 = arith.constant 0 : i32
    %c0_i32_0 = arith.constant 0 : i32
    %c0_i32_1 = arith.constant 0 : i32
    %c0_i32_2 = arith.constant 0 : i32
    return %c0_i32, %c0_i32_0, %c0_i32_1 : i32, i32, i32
  }
  func.func @transform_14(%arg0: i32) -> (i32, i32, i32) {
    %c0_i32 = arith.constant 0 : i32
    %c0_i32_0 = arith.constant 0 : i32
    %c0_i32_1 = arith.constant 0 : i32
    %c0_i32_2 = arith.constant 0 : i32
    return %c0_i32, %c0_i32_0, %c0_i32_1 : i32, i32, i32
  }
  func.func @transform_15(%arg0: i32) -> (i32, i32) {
    %c0_i32 = arith.constant 0 : i32
    %c0_i32_0 = arith.constant 0 : i32
    %c0_i32_1 = arith.constant 0 : i32
    return %c0_i32, %c0_i32_0 : i32, i32
  }
  func.func @transform_16(%arg0: i32) -> (i32, i32) {
    %c0_i32 = arith.constant 0 : i32
    %c0_i32_0 = arith.constant 0 : i32
    %c0_i32_1 = arith.constant 0 : i32
    return %c0_i32, %c0_i32_0 : i32, i32
  }
  func.func @transform_17(%arg0: i32) -> (i32, i32) {
    %c0_i32 = arith.constant 0 : i32
    %c0_i32_0 = arith.constant 0 : i32
    return %arg0, %c0_i32 : i32, i32
  }
  func.func @transform_18(%arg0: i32) -> (i32, i32, i32, i32) {
    %c0_i32 = arith.constant 0 : i32
    %c0_i32_0 = arith.constant 0 : i32
    %c0_i32_1 = arith.constant 0 : i32
    %c0_i32_2 = arith.constant 0 : i32
    return %arg0, %c0_i32, %c0_i32_0, %c0_i32_1 : i32, i32, i32, i32
  }
}

</mosaic_0001>

<llo_original>
// kernel: transformer_forward.1
$region0: #{transformer_forward.1}
  #allocation0 [shape = 'u32[]', space=smem, size = 0x4, offset = 0x4, fixed_abs, tag = 'smem constant byte address 0x4 - core index']
  #allocation1 [shape = 'u32[72,128]{1,0:T(1,128)}', space=vmem, size = 0x9000, scoped, tag = 'internal scratch']
  #allocation2 [shape = 'f32[8,96]{1,0:T(8,128)}', space=vmem, size = 0x1000, scoped, tag = 'scratch operand']
  #allocation3 [shape = 'f32[8,32]{1,0:T(8,128)}', space=vmem, size = 0x1000, scoped, tag = 'scratch operand']
  %s0 = inlined_call_operand.vmem [shape: f32[16,32], index: 0, kind: input, shape index: {}]
  %s1 = inlined_call_operand.vmem [shape: f32[1,32], index: 1, kind: input, shape index: {}]
  %s2 = inlined_call_operand.vmem [shape: f32[1,32], index: 2, kind: input, shape index: {}]
  %s3 = inlined_call_operand.vmem [shape: bf16[2,32,96], index: 3, kind: input, shape index: {}]
  %s4 = inlined_call_operand.vmem [shape: f32[2,1,96], index: 4, kind: input, shape index: {}]
  %s5 = inlined_call_operand.vmem [shape: bf16[2,32,32], index: 5, kind: input, shape index: {}]
  %s6 = inlined_call_operand.vmem [shape: f32[2,1,32], index: 6, kind: input, shape index: {}]
  %s7 = inlined_call_operand.vmem [shape: f32[2,1,32], index: 7, kind: input, shape index: {}]
  %s8 = inlined_call_operand.vmem [shape: f32[2,1,32], index: 8, kind: input, shape index: {}]
  %s9 = inlined_call_operand.vmem [shape: bf16[2,32,64], index: 9, kind: input, shape index: {}]
  %s10 = inlined_call_operand.vmem [shape: f32[2,1,64], index: 10, kind: input, shape index: {}]
  %s11 = inlined_call_operand.vmem [shape: bf16[2,64,32], index: 11, kind: input, shape index: {}]
  %s12 = inlined_call_operand.vmem [shape: f32[2,1,32], index: 12, kind: input, shape index: {}]
  %s13 = inlined_call_operand.vmem [shape: f32[2,1,32], index: 13, kind: input, shape index: {}]
  %s14 = inlined_call_operand.vmem [shape: f32[2,1,32], index: 14, kind: input, shape index: {}]
  %s15 = inlined_call_operand.vmem [shape: bf16[32,64], index: 15, kind: input, shape index: {}]
  %s16 = inlined_call_operand.vmem [shape: f32[1,64], index: 16, kind: input, shape index: {}]
  %s17 = inlined_call_operand.hbm [shape: f32[16,64], index: 17, kind: output, shape index: {0}]
  %s18 = inlined_call_operand.hbm [shape: f32[2,2,8,8], index: 18, kind: output, shape index: {1}]
  %19 = xla_tuple %s17, %s18
  %s20 = sld [smem:[#allocation0]]
  $region109: #{transformer_forward.1} parent=0
    _
  %s22 = ssub.s32 1, %s20
  %s23 = scalar_select 0, %s22, %s20
  $region1: #{transformer_forward.1} parent=0
    #allocation4 [shape = 'u8[8192]{0}', space=vmem, size = 0x2000, scoped, tag = 'output window, operand 0']
    #allocation5 [shape = 's32[2]{0}', space=sflag, size = 0x8, scoped, tag = 'scoped memory for transformer_forward.1']
    #allocation6 [shape = 'u8[16384]{0}', space=vmem, size = 0x4000, scoped, tag = 'output window, operand 1']
    #allocation7 [shape = 's32[2]{0}', space=sflag, size = 0x8, scoped, tag = 'scoped memory for transformer_forward.1']
    %24 = vsyncpa [#allocation5], 0
    %s25 = scalar_lea.sflag [#allocation5], 1
    %26 = vsyncpa %s25, 0
    %27 = vsyncpa [#allocation7], 0
    %s28 = scalar_lea.sflag [#allocation7], 1
    %29 = vsyncpa %s28, 0
    loop: start=0, step=1, limit=4
    $region2: #{transformer_forward.1} parent=1 // loop_pre_header
      _
    $region3: #{transformer_forward.1} parent=1 // loop_header
      %s31 = sphi 0, %s35
      %p32 = scmp.ge.s32.totalorder %s31, 4
      %s41 = sphi 0, %s43
      %s44 = sphi 0, %s41
      %s45 = sphi 0, %s44
      %s61 = sphi 0, %s45
      %s65 = sphi 0, %s65
      %s67 = sphi 0, %s65
      %s68 = sphi 0, %s67
      %s82 = sphi 0, %s68
      %s86 = sphi 0, %s86
      %s88 = sphi 0, %s86
      %s89 = sphi 0, %s88
      %s103 = sphi 0, %s89
      %s107 = sphi 0, %s107
      %s109 = sphi 0, %s107
      %s110 = sphi 0, %s109
      %s124 = sphi 0, %s110
      %s128 = sphi 0, %s128
      %s130 = sphi 0, %s128
      %s131 = sphi 0, %s130
      %s145 = sphi 0, %s131
      %s149 = sphi 0, %s149
      %s151 = sphi 0, %s149
      %s152 = sphi 0, %s151
      %s166 = sphi 0, %s152
      %s170 = sphi 0, %s170
      %s172 = sphi 0, %s170
      %s173 = sphi 0, %s172
      %s187 = sphi 0, %s173
      %s191 = sphi 0, %s191
      %s193 = sphi 0, %s191
      %s194 = sphi 0, %s193
      %s208 = sphi 0, %s194
      %s212 = sphi 0, %s212
      %s214 = sphi 0, %s212
      %s215 = sphi 0, %s214
      %s229 = sphi 0, %s215
      %s233 = sphi 0, %s233
      %s235 = sphi 0, %s233
      %s236 = sphi 0, %s235
      %s250 = sphi 0, %s236
      %s254 = sphi 0, %s254
      %s256 = sphi 0, %s254
      %s257 = sphi 0, %s256
      %s271 = sphi 0, %s257
      %s275 = sphi 0, %s275
      %s277 = sphi 0, %s275
      %s278 = sphi 0, %s277
      %s292 = sphi 0, %s278
      %s296 = sphi 0, %s296
      %s298 = sphi 0, %s296
      %s299 = sphi 0, %s298
      %s313 = sphi 0, %s299
      %s317 = sphi 0, %s317
      %s319 = sphi 0, %s317
      %s320 = sphi 0, %s319
      %s334 = sphi 0, %s320
      %s338 = sphi 0, %s338
      %s340 = sphi 0, %s338
      %s341 = sphi 0, %s340
      %s355 = sphi 0, %s341
      %s359 = sphi 0, %s359
      %s361 = sphi 0, %s359
      %s362 = sphi 0, %s361
      %s376 = sphi 0, %s362
      %s380 = sphi 0, %s380
      %s382 = sphi 0, %s380
      %s383 = sphi 0, %s382
      %s397 = sphi 0, %s383
      %s403 = sphi 0, %s405
      %s406 = sphi 0, %s403
      %s407 = sphi 0, %s406
      %s423 = sphi 0, %s407
      %s429 = sphi 0, %s431
      %s432 = sphi 0, %s429
      %s433 = sphi 0, %s432
      %s449 = sphi 0, %s433
    $region4: #{transformer_forward.1} parent=1 // loop_header_branch
      %34 = sbr.rel (%p32) target = $region8
    $region5: #{transformer_forward.1} parent=1 // loop_body
      %s36 = ssub.s32 %s31, 1
      %s37 = ssub.s32 %s31, 2
      %s38 = sadd.s32 %s31, 1
      %s39 = ssub.s32 %s31, %s38
      %p40 = scmp.eq.s32.totalorder %s39, 0
      %s42 = sadd.s32 %s41, 1
      %s43 = scalar_select %p40, %s41, %s42
      %p46 = pneg %p40
      %p47 = scmp.eq.s32.totalorder %s31, 1
      %p48 = por %p46, %p47
      %p49 = scmp.ne.s32.totalorder %s41, %s44
      %p50 = scmp.eq.s32.totalorder %s31, 0
      %p51 = por %p49, %p50
      %p52 = scmp.ne.s32.totalorder %s41, %s44
      %p53 = scmp.eq.s32.totalorder %s36, 1
      %p54 = por %p52, %p53
      %p55 = scmp.ne.s32.totalorder %s44, %s45
      %p56 = scmp.eq.s32.totalorder %s36, 0
      %p57 = por %p55, %p56
      %p58 = scmp.ne.s32.totalorder %s44, %s45
      %p59 = scmp.eq.s32.totalorder %s37, 1
      %p60 = por %p58, %p59
      %p62 = scmp.ne.s32.totalorder %s45, %s61
      %p63 = scmp.eq.s32.totalorder %s37, 0
      %p64 = por %p62, %p63
      %s66 = sadd.s32 %s65, 1
      %p69 = scmp.eq.s32.totalorder %s31, 1
      %p70 = scmp.ne.s32.totalorder %s65, %s67
      %p71 = scmp.eq.s32.totalorder %s31, 0
      %p72 = por %p70, %p71
      %p73 = scmp.ne.s32.totalorder %s65, %s67
      %p74 = scmp.eq.s32.totalorder %s36, 1
      %p75 = por %p73, %p74
      %p76 = scmp.ne.s32.totalorder %s67, %s68
      %p77 = scmp.eq.s32.totalorder %s36, 0
      %p78 = por %p76, %p77
      %p79 = scmp.ne.s32.totalorder %s67, %s68
      %p80 = scmp.eq.s32.totalorder %s37, 1
      %p81 = por %p79, %p80
      %p83 = scmp.ne.s32.totalorder %s68, %s82
      %p84 = scmp.eq.s32.totalorder %s37, 0
      %p85 = por %p83, %p84
      %s87 = sadd.s32 %s86, 1
      %p90 = scmp.eq.s32.totalorder %s31, 1
      %p91 = scmp.ne.s32.totalorder %s86, %s88
      %p92 = scmp.eq.s32.totalorder %s31, 0
      %p93 = por %p91, %p92
      %p94 = scmp.ne.s32.totalorder %s86, %s88
      %p95 = scmp.eq.s32.totalorder %s36, 1
      %p96 = por %p94, %p95
      %p97 = scmp.ne.s32.totalorder %s88, %s89
      %p98 = scmp.eq.s32.totalorder %s36, 0
      %p99 = por %p97, %p98
      %p100 = scmp.ne.s32.totalorder %s88, %s89
      %p101 = scmp.eq.s32.totalorder %s37, 1
      %p102 = por %p100, %p101
      %p104 = scmp.ne.s32.totalorder %s89, %s103
      %p105 = scmp.eq.s32.totalorder %s37, 0
      %p106 = por %p104, %p105
      %s108 = sadd.s32 %s107, 1
      %p111 = scmp.eq.s32.totalorder %s31, 1
      %p112 = scmp.ne.s32.totalorder %s107, %s109
      %p113 = scmp.eq.s32.totalorder %s31, 0
      %p114 = por %p112, %p113
      %p115 = scmp.ne.s32.totalorder %s107, %s109
      %p116 = scmp.eq.s32.totalorder %s36, 1
      %p117 = por %p115, %p116
      %p118 = scmp.ne.s32.totalorder %s109, %s110
      %p119 = scmp.eq.s32.totalorder %s36, 0
      %p120 = por %p118, %p119
      %p121 = scmp.ne.s32.totalorder %s109, %s110
      %p122 = scmp.eq.s32.totalorder %s37, 1
      %p123 = por %p121, %p122
      %p125 = scmp.ne.s32.totalorder %s110, %s124
      %p126 = scmp.eq.s32.totalorder %s37, 0
      %p127 = por %p125, %p126
      %s129 = sadd.s32 %s128, 1
      %p132 = scmp.eq.s32.totalorder %s31, 1
      %p133 = scmp.ne.s32.totalorder %s128, %s130
      %p134 = scmp.eq.s32.totalorder %s31, 0
      %p135 = por %p133, %p134
      %p136 = scmp.ne.s32.totalorder %s128, %s130
      %p137 = scmp.eq.s32.totalorder %s36, 1
      %p138 = por %p136, %p137
      %p139 = scmp.ne.s32.totalorder %s130, %s131
      %p140 = scmp.eq.s32.totalorder %s36, 0
      %p141 = por %p139, %p140
      %p142 = scmp.ne.s32.totalorder %s130, %s131
      %p143 = scmp.eq.s32.totalorder %s37, 1
      %p144 = por %p142, %p143
      %p146 = scmp.ne.s32.totalorder %s131, %s145
      %p147 = scmp.eq.s32.totalorder %s37, 0
      %p148 = por %p146, %p147
      %s150 = sadd.s32 %s149, 1
      %p153 = scmp.eq.s32.totalorder %s31, 1
      %p154 = scmp.ne.s32.totalorder %s149, %s151
      %p155 = scmp.eq.s32.totalorder %s31, 0
      %p156 = por %p154, %p155
      %p157 = scmp.ne.s32.totalorder %s149, %s151
      %p158 = scmp.eq.s32.totalorder %s36, 1
      %p159 = por %p157, %p158
      %p160 = scmp.ne.s32.totalorder %s151, %s152
      %p161 = scmp.eq.s32.totalorder %s36, 0
      %p162 = por %p160, %p161
      %p163 = scmp.ne.s32.totalorder %s151, %s152
      %p164 = scmp.eq.s32.totalorder %s37, 1
      %p165 = por %p163, %p164
      %p167 = scmp.ne.s32.totalorder %s152, %s166
      %p168 = scmp.eq.s32.totalorder %s37, 0
      %p169 = por %p167, %p168
      %s171 = sadd.s32 %s170, 1
      %p174 = scmp.eq.s32.totalorder %s31, 1
      %p175 = scmp.ne.s32.totalorder %s170, %s172
      %p176 = scmp.eq.s32.totalorder %s31, 0
      %p177 = por %p175, %p176
      %p178 = scmp.ne.s32.totalorder %s170, %s172
      %p179 = scmp.eq.s32.totalorder %s36, 1
      %p180 = por %p178, %p179
      %p181 = scmp.ne.s32.totalorder %s172, %s173
      %p182 = scmp.eq.s32.totalorder %s36, 0
      %p183 = por %p181, %p182
      %p184 = scmp.ne.s32.totalorder %s172, %s173
      %p185 = scmp.eq.s32.totalorder %s37, 1
      %p186 = por %p184, %p185
      %p188 = scmp.ne.s32.totalorder %s173, %s187
      %p189 = scmp.eq.s32.totalorder %s37, 0
      %p190 = por %p188, %p189
      %s192 = sadd.s32 %s191, 1
      %p195 = scmp.eq.s32.totalorder %s31, 1
      %p196 = scmp.ne.s32.totalorder %s191, %s193
      %p197 = scmp.eq.s32.totalorder %s31, 0
      %p198 = por %p196, %p197
      %p199 = scmp.ne.s32.totalorder %s191, %s193
      %p200 = scmp.eq.s32.totalorder %s36, 1
      %p201 = por %p199, %p200
      %p202 = scmp.ne.s32.totalorder %s193, %s194
      %p203 = scmp.eq.s32.totalorder %s36, 0
      %p204 = por %p202, %p203
      %p205 = scmp.ne.s32.totalorder %s193, %s194
      %p206 = scmp.eq.s32.totalorder %s37, 1
      %p207 = por %p205, %p206
      %p209 = scmp.ne.s32.totalorder %s194, %s208
      %p210 = scmp.eq.s32.totalorder %s37, 0
      %p211 = por %p209, %p210
      %s213 = sadd.s32 %s212, 1
      %p216 = scmp.eq.s32.totalorder %s31, 1
      %p217 = scmp.ne.s32.totalorder %s212, %s214
      %p218 = scmp.eq.s32.totalorder %s31, 0
      %p219 = por %p217, %p218
      %p220 = scmp.ne.s32.totalorder %s212, %s214
      %p221 = scmp.eq.s32.totalorder %s36, 1
      %p222 = por %p220, %p221
      %p223 = scmp.ne.s32.totalorder %s214, %s215
      %p224 = scmp.eq.s32.totalorder %s36, 0
      %p225 = por %p223, %p224
      %p226 = scmp.ne.s32.totalorder %s214, %s215
      %p227 = scmp.eq.s32.totalorder %s37, 1
      %p228 = por %p226, %p227
      %p230 = scmp.ne.s32.totalorder %s215, %s229
      %p231 = scmp.eq.s32.totalorder %s37, 0
      %p232 = por %p230, %p231
      %s234 = sadd.s32 %s233, 1
      %p237 = scmp.eq.s32.totalorder %s31, 1
      %p238 = scmp.ne.s32.totalorder %s233, %s235
      %p239 = scmp.eq.s32.totalorder %s31, 0
      %p240 = por %p238, %p239
      %p241 = scmp.ne.s32.totalorder %s233, %s235
      %p242 = scmp.eq.s32.totalorder %s36, 1
      %p243 = por %p241, %p242
      %p244 = scmp.ne.s32.totalorder %s235, %s236
      %p245 = scmp.eq.s32.totalorder %s36, 0
      %p246 = por %p244, %p245
      %p247 = scmp.ne.s32.totalorder %s235, %s236
      %p248 = scmp.eq.s32.totalorder %s37, 1
      %p249 = por %p247, %p248
      %p251 = scmp.ne.s32.totalorder %s236, %s250
      %p252 = scmp.eq.s32.totalorder %s37, 0
      %p253 = por %p251, %p252
      %s255 = sadd.s32 %s254, 1
      %p258 = scmp.eq.s32.totalorder %s31, 1
      %p259 = scmp.ne.s32.totalorder %s254, %s256
      %p260 = scmp.eq.s32.totalorder %s31, 0
      %p261 = por %p259, %p260
      %p262 = scmp.ne.s32.totalorder %s254, %s256
      %p263 = scmp.eq.s32.totalorder %s36, 1
      %p264 = por %p262, %p263
      %p265 = scmp.ne.s32.totalorder %s256, %s257
      %p266 = scmp.eq.s32.totalorder %s36, 0
      %p267 = por %p265, %p266
      %p268 = scmp.ne.s32.totalorder %s256, %s257
      %p269 = scmp.eq.s32.totalorder %s37, 1
      %p270 = por %p268, %p269
      %p272 = scmp.ne.s32.totalorder %s257, %s271
      %p273 = scmp.eq.s32.totalorder %s37, 0
      %p274 = por %p272, %p273
      %s276 = sadd.s32 %s275, 1
      %p279 = scmp.eq.s32.totalorder %s31, 1
      %p280 = scmp.ne.s32.totalorder %s275, %s277
      %p281 = scmp.eq.s32.totalorder %s31, 0
      %p282 = por %p280, %p281
      %p283 = scmp.ne.s32.totalorder %s275, %s277
      %p284 = scmp.eq.s32.totalorder %s36, 1
      %p285 = por %p283, %p284
      %p286 = scmp.ne.s32.totalorder %s277, %s278
      %p287 = scmp.eq.s32.totalorder %s36, 0
      %p288 = por %p286, %p287
      %p289 = scmp.ne.s32.totalorder %s277, %s278
      %p290 = scmp.eq.s32.totalorder %s37, 1
      %p291 = por %p289, %p290
      %p293 = scmp.ne.s32.totalorder %s278, %s292
      %p294 = scmp.eq.s32.totalorder %s37, 0
      %p295 = por %p293, %p294
      %s297 = sadd.s32 %s296, 1
      %p300 = scmp.eq.s32.totalorder %s31, 1
      %p301 = scmp.ne.s32.totalorder %s296, %s298
      %p302 = scmp.eq.s32.totalorder %s31, 0
      %p303 = por %p301, %p302
      %p304 = scmp.ne.s32.totalorder %s296, %s298
      %p305 = scmp.eq.s32.totalorder %s36, 1
      %p306 = por %p304, %p305
      %p307 = scmp.ne.s32.totalorder %s298, %s299
      %p308 = scmp.eq.s32.totalorder %s36, 0
      %p309 = por %p307, %p308
      %p310 = scmp.ne.s32.totalorder %s298, %s299
      %p311 = scmp.eq.s32.totalorder %s37, 1
      %p312 = por %p310, %p311
      %p314 = scmp.ne.s32.totalorder %s299, %s313
      %p315 = scmp.eq.s32.totalorder %s37, 0
      %p316 = por %p314, %p315
      %s318 = sadd.s32 %s317, 1
      %p321 = scmp.eq.s32.totalorder %s31, 1
      %p322 = scmp.ne.s32.totalorder %s317, %s319
      %p323 = scmp.eq.s32.totalorder %s31, 0
      %p324 = por %p322, %p323
      %p325 = scmp.ne.s32.totalorder %s317, %s319
      %p326 = scmp.eq.s32.totalorder %s36, 1
      %p327 = por %p325, %p326
      %p328 = scmp.ne.s32.totalorder %s319, %s320
      %p329 = scmp.eq.s32.totalorder %s36, 0
      %p330 = por %p328, %p329
      %p331 = scmp.ne.s32.totalorder %s319, %s320
      %p332 = scmp.eq.s32.totalorder %s37, 1
      %p333 = por %p331, %p332
      %p335 = scmp.ne.s32.totalorder %s320, %s334
      %p336 = scmp.eq.s32.totalorder %s37, 0
      %p337 = por %p335, %p336
      %s339 = sadd.s32 %s338, 1
      %p342 = scmp.eq.s32.totalorder %s31, 1
      %p343 = scmp.ne.s32.totalorder %s338, %s340
      %p344 = scmp.eq.s32.totalorder %s31, 0
      %p345 = por %p343, %p344
      %p346 = scmp.ne.s32.totalorder %s338, %s340
      %p347 = scmp.eq.s32.totalorder %s36, 1
      %p348 = por %p346, %p347
      %p349 = scmp.ne.s32.totalorder %s340, %s341
      %p350 = scmp.eq.s32.totalorder %s36, 0
      %p351 = por %p349, %p350
      %p352 = scmp.ne.s32.totalorder %s340, %s341
      %p353 = scmp.eq.s32.totalorder %s37, 1
      %p354 = por %p352, %p353
      %p356 = scmp.ne.s32.totalorder %s341, %s355
      %p357 = scmp.eq.s32.totalorder %s37, 0
      %p358 = por %p356, %p357
      %s360 = sadd.s32 %s359, 1
      %p363 = scmp.eq.s32.totalorder %s31, 1
      %p364 = scmp.ne.s32.totalorder %s359, %s361
      %p365 = scmp.eq.s32.totalorder %s31, 0
      %p366 = por %p364, %p365
      %p367 = scmp.ne.s32.totalorder %s359, %s361
      %p368 = scmp.eq.s32.totalorder %s36, 1
      %p369 = por %p367, %p368
      %p370 = scmp.ne.s32.totalorder %s361, %s362
      %p371 = scmp.eq.s32.totalorder %s36, 0
      %p372 = por %p370, %p371
      %p373 = scmp.ne.s32.totalorder %s361, %s362
      %p374 = scmp.eq.s32.totalorder %s37, 1
      %p375 = por %p373, %p374
      %p377 = scmp.ne.s32.totalorder %s362, %s376
      %p378 = scmp.eq.s32.totalorder %s37, 0
      %p379 = por %p377, %p378
      %s381 = sadd.s32 %s380, 1
      %p384 = scmp.eq.s32.totalorder %s31, 1
      %p385 = scmp.ne.s32.totalorder %s380, %s382
      %p386 = scmp.eq.s32.totalorder %s31, 0
      %p387 = por %p385, %p386
      %p388 = scmp.ne.s32.totalorder %s380, %s382
      %p389 = scmp.eq.s32.totalorder %s36, 1
      %p390 = por %p388, %p389
      %p391 = scmp.ne.s32.totalorder %s382, %s383
      %p392 = scmp.eq.s32.totalorder %s36, 0
      %p393 = por %p391, %p392
      %p394 = scmp.ne.s32.totalorder %s382, %s383
      %p395 = scmp.eq.s32.totalorder %s37, 1
      %p396 = por %p394, %p395
      %p398 = scmp.ne.s32.totalorder %s383, %s397
      %p399 = scmp.eq.s32.totalorder %s37, 0
      %p400 = por %p398, %p399
      %s401 = ssub.s32 %s31, %s38
      %p402 = scmp.eq.s32.totalorder %s401, 0
      %s404 = sadd.s32 %s403, 1
      %s405 = scalar_select %p402, %s403, %s404
      %p408 = pneg %p402
      %p409 = scmp.eq.s32.totalorder %s31, 1
      %p410 = por %p408, %p409
      %p411 = scmp.ne.s32.totalorder %s403, %s406
      %p412 = scmp.eq.s32.totalorder %s31, 0
      %p413 = por %p411, %p412
      %p414 = scmp.ne.s32.totalorder %s403, %s406
      %p415 = scmp.eq.s32.totalorder %s36, 1
      %p416 = por %p414, %p415
      %p417 = scmp.ne.s32.totalorder %s406, %s407
      %p418 = scmp.eq.s32.totalorder %s36, 0
      %p419 = por %p417, %p418
      %p420 = scmp.ne.s32.totalorder %s406, %s407
      %p421 = scmp.eq.s32.totalorder %s37, 1
      %p422 = por %p420, %p421
      %p424 = scmp.ne.s32.totalorder %s407, %s423
      %p425 = scmp.eq.s32.totalorder %s37, 0
      %p426 = por %p424, %p425
      %s427 = ssub.s32 %s31, %s38
      %p428 = scmp.eq.s32.totalorder %s427, 0
      %s430 = sadd.s32 %s429, 1
      %s431 = scalar_select %p428, %s429, %s430
      %p434 = pneg %p428
      %p435 = scmp.eq.s32.totalorder %s31, 1
      %p436 = por %p434, %p435
      %p437 = scmp.ne.s32.totalorder %s429, %s432
      %p438 = scmp.eq.s32.totalorder %s31, 0
      %p439 = por %p437, %p438
      %p440 = scmp.ne.s32.totalorder %s429, %s432
      %p441 = scmp.eq.s32.totalorder %s36, 1
      %p442 = por %p440, %p441
      %p443 = scmp.ne.s32.totalorder %s432, %s433
      %p444 = scmp.eq.s32.totalorder %s36, 0
      %p445 = por %p443, %p444
      %p446 = scmp.ne.s32.totalorder %s432, %s433
      %p447 = scmp.eq.s32.totalorder %s37, 1
      %p448 = por %p446, %p447
      %p450 = scmp.ne.s32.totalorder %s433, %s449
      %p451 = scmp.eq.s32.totalorder %s37, 0
      %p452 = por %p450, %p451
      %p453 = scmp.le.s32.totalorder 1, %s31
      %p454 = scmp.lt.s32.totalorder %s31, 3
      %p455 = pnand %p453, %p454
      %p456 = pneg %p455
      // Predicated region
      $region9: #{transformer_forward.1} parent=5 // pred_check
        _
      $region10: #{transformer_forward.1} parent=5 // pred_check_branch
        %458 = sbr.rel (%p455) target = $region12
      $region11: #{transformer_forward.1} parent=5 // pred_region
        %s459 = ssub.s32 %s31, 1
        // Predicated region
        $region13: #{transformer_forward.1} parent=11 // pred_check
          %p460 = pneg %p78
        $region14: #{transformer_forward.1} parent=11 // pred_check_branch
          %462 = sbr.rel (%p460) target = $region16
        $region15: #{transformer_forward.1} parent=11 // pred_region
          _
        $region16: #{transformer_forward.1} parent=11 // pred_fallthru
          _
        // Predicated region
        $region17: #{transformer_forward.1} parent=11 // pred_check
          %p463 = pneg %p99
        $region18: #{transformer_forward.1} parent=11 // pred_check_branch
          %465 = sbr.rel (%p463) target = $region20
        $region19: #{transformer_forward.1} parent=11 // pred_region
          _
        $region20: #{transformer_forward.1} parent=11 // pred_fallthru
          _
        // Predicated region
        $region21: #{transformer_forward.1} parent=11 // pred_check
          %p466 = pneg %p120
        $region22: #{transformer_forward.1} parent=11 // pred_check_branch
          %468 = sbr.rel (%p466) target = $region24
        $region23: #{transformer_forward.1} parent=11 // pred_region
          _
        $region24: #{transformer_forward.1} parent=11 // pred_fallthru
          _
        // Predicated region
        $region25: #{transformer_forward.1} parent=11 // pred_check
          %p469 = pneg %p141
        $region26: #{transformer_forward.1} parent=11 // pred_check_branch
          %471 = sbr.rel (%p469) target = $region28
        $region27: #{transformer_forward.1} parent=11 // pred_region
          _
        $region28: #{transformer_forward.1} parent=11 // pred_fallthru
          _
        // Predicated region
        $region29: #{transformer_forward.1} parent=11 // pred_check
          %p472 = pneg %p162
        $region30: #{transformer_forward.1} parent=11 // pred_check_branch
          %474 = sbr.rel (%p472) target = $region32
        $region31: #{transformer_forward.1} parent=11 // pred_region
          _
        $region32: #{transformer_forward.1} parent=11 // pred_fallthru
          _
        // Predicated region
        $region33: #{transformer_forward.1} parent=11 // pred_check
          %p475 = pneg %p183
        $region34: #{transformer_forward.1} parent=11 // pred_check_branch
          %477 = sbr.rel (%p475) target = $region36
        $region35: #{transformer_forward.1} parent=11 // pred_region
          _
        $region36: #{transformer_forward.1} parent=11 // pred_fallthru
          _
        // Predicated region
        $region37: #{transformer_forward.1} parent=11 // pred_check
          %p478 = pneg %p204
        $region38: #{transformer_forward.1} parent=11 // pred_check_branch
          %480 = sbr.rel (%p478) target = $region40
        $region39: #{transformer_forward.1} parent=11 // pred_region
          _
        $region40: #{transformer_forward.1} parent=11 // pred_fallthru
          _
        // Predicated region
        $region41: #{transformer_forward.1} parent=11 // pred_check
          %p481 = pneg %p225
        $region42: #{transformer_forward.1} parent=11 // pred_check_branch
          %483 = sbr.rel (%p481) target = $region44
        $region43: #{transformer_forward.1} parent=11 // pred_region
          _
        $region44: #{transformer_forward.1} parent=11 // pred_fallthru
          _
        // Predicated region
        $region45: #{transformer_forward.1} parent=11 // pred_check
          %p484 = pneg %p246
        $region46: #{transformer_forward.1} parent=11 // pred_check_branch
          %486 = sbr.rel (%p484) target = $region48
        $region47: #{transformer_forward.1} parent=11 // pred_region
          _
        $region48: #{transformer_forward.1} parent=11 // pred_fallthru
          _
        // Predicated region
        $region49: #{transformer_forward.1} parent=11 // pred_check
          %p487 = pneg %p267
        $region50: #{transformer_forward.1} parent=11 // pred_check_branch
          %489 = sbr.rel (%p487) target = $region52
        $region51: #{transformer_forward.1} parent=11 // pred_region
          _
        $region52: #{transformer_forward.1} parent=11 // pred_fallthru
          _
        // Predicated region
        $region53: #{transformer_forward.1} parent=11 // pred_check
          %p490 = pneg %p288
        $region54: #{transformer_forward.1} parent=11 // pred_check_branch
          %492 = sbr.rel (%p490) target = $region56
        $region55: #{transformer_forward.1} parent=11 // pred_region
          _
        $region56: #{transformer_forward.1} parent=11 // pred_fallthru
          _
        // Predicated region
        $region57: #{transformer_forward.1} parent=11 // pred_check
          %p493 = pneg %p309
        $region58: #{transformer_forward.1} parent=11 // pred_check_branch
          %495 = sbr.rel (%p493) target = $region60
        $region59: #{transformer_forward.1} parent=11 // pred_region
          _
        $region60: #{transformer_forward.1} parent=11 // pred_fallthru
          _
        // Predicated region
        $region61: #{transformer_forward.1} parent=11 // pred_check
          %p496 = pneg %p330
        $region62: #{transformer_forward.1} parent=11 // pred_check_branch
          %498 = sbr.rel (%p496) target = $region64
        $region63: #{transformer_forward.1} parent=11 // pred_region
          _
        $region64: #{transformer_forward.1} parent=11 // pred_fallthru
          _
        // Predicated region
        $region65: #{transformer_forward.1} parent=11 // pred_check
          %p499 = pneg %p351
        $region66: #{transformer_forward.1} parent=11 // pred_check_branch
          %501 = sbr.rel (%p499) target = $region68
        $region67: #{transformer_forward.1} parent=11 // pred_region
          _
        $region68: #{transformer_forward.1} parent=11 // pred_fallthru
          _
        // Predicated region
        $region69: #{transformer_forward.1} parent=11 // pred_check
          %p502 = pneg %p372
        $region70: #{transformer_forward.1} parent=11 // pred_check_branch
          %504 = sbr.rel (%p502) target = $region72
        $region71: #{transformer_forward.1} parent=11 // pred_region
          _
        $region72: #{transformer_forward.1} parent=11 // pred_fallthru
          _
        // Predicated region
        $region73: #{transformer_forward.1} parent=11 // pred_check
          %p505 = pneg %p393
        $region74: #{transformer_forward.1} parent=11 // pred_check_branch
          %507 = sbr.rel (%p505) target = $region76
        $region75: #{transformer_forward.1} parent=11 // pred_region
          _
        $region76: #{transformer_forward.1} parent=11 // pred_fallthru
          _
      $region12: #{transformer_forward.1} parent=5 // pred_fallthru
        _
      %p508 = scmp.lt.s32.totalorder %s31, 2
      // Predicated region
      $region77: #{transformer_forward.1} parent=5 // pred_check
        %p509 = pneg %p508
      $region78: #{transformer_forward.1} parent=5 // pred_check_branch
        %511 = sbr.rel (%p509) target = $region80
      $region79: #{transformer_forward.1} parent=5 // pred_region
        // Predicated region
        $region81: #{transformer_forward.1} parent=79 // pred_check
          %p512 = pneg %p51
        $region82: #{transformer_forward.1} parent=79 // pred_check_branch
          %514 = sbr.rel (%p512) target = $region84
        $region83: #{transformer_forward.1} parent=79 // pred_region
          %p515 = scmp.lt.s32.totalorder %s31, 1
          %s516 = scalar_select %p515, %s31, 1
          %s517 = smul.addr %s516, 8
          %s518 = scalar_lea.vmem %s0, %s517
        $region84: #{transformer_forward.1} parent=79 // pred_fallthru
          _
      $region80: #{transformer_forward.1} parent=5 // pred_fallthru
        _
      %p519 = scmp.le.s32.totalorder 1, %s31
      %p520 = scmp.lt.s32.totalorder %s31, 3
      %p521 = pnand %p519, %p520
      %p522 = pneg %p521
      // Predicated region
      $region85: #{transformer_forward.1} parent=5 // pred_check
        _
      $region86: #{transformer_forward.1} parent=5 // pred_check_branch
        %524 = sbr.rel (%p521) target = $region88
      $region87: #{transformer_forward.1} parent=5 // pred_region
        %s525 = ssub.s32 %s31, 1
        %p526 = scmp.lt.s32.totalorder %s36, 1
        %s527 = scalar_select %p526, %s36, 1
        %s528 = smul.addr %s527, 8
        %s529 = scalar_lea.vmem %s0, %s528
        %p530 = pneg %p57
        %p531 = pneg %p54
        %p532 = pneg %p78
        %p533 = pneg %p75
        %p534 = pneg %p99
        %p535 = pneg %p96
        %p536 = pneg %p120
        %p537 = pneg %p117
        %p538 = pneg %p141
        %p539 = pneg %p138
        %p540 = pneg %p162
        %p541 = pneg %p159
        %p542 = pneg %p183
        %p543 = pneg %p180
        %p544 = pneg %p204
        %p545 = pneg %p201
        %p546 = pneg %p225
        %p547 = pneg %p222
        %p548 = pneg %p246
        %p549 = pneg %p243
        %p550 = pneg %p267
        %p551 = pneg %p264
        %p552 = pneg %p288
        %p553 = pneg %p285
        %p554 = pneg %p309
        %p555 = pneg %p306
        %p556 = pneg %p330
        %p557 = pneg %p327
        %p558 = pneg %p351
        %p559 = pneg %p348
        %p560 = pneg %p372
        %p561 = pneg %p369
        %p562 = pneg %p393
        %p563 = pneg %p390
        %p564 = pneg %p419
        %p565 = pneg %p416
        %s566 = sand.u32 %s406, 1
        %s567 = scalar_lea.sflag [#allocation5], %s566
        %s568 = sand.u32 %s406, 1
        %s569 = smul.addr %s568, 8
        %s570 = scalar_lea.vmem [#allocation4], %s569
        %p571 = pneg %p445
        %p572 = pneg %p442
        %s573 = sand.u32 %s432, 1
        %s574 = scalar_lea.sflag [#allocation7], %s573
        %s575 = sand.u32 %s432, 1
        %s576 = smul.addr %s575, 16
        %s577 = scalar_lea.vmem [#allocation6], %s576
        %p578 = scmp.lt.s32.totalorder %s36, 1
        %s579 = scalar_select %p578, %s36, 1
        %s580 = smul.addr %s579, 8
        %s581 = scalar_lea.vmem %s0, %s580
        %v583 = vlaneseq
        %v584 = vshrl.u32 %v583, 7
        %v585 = vlaneseq
        %v586 = vand.u32 %v585, 127
        %vm587 = vcmp.ge.s32.totalorder %v584, %v586
        %v588 = vld [vmem:[%s581] sm:$0xff]
        %v589 = vld [vmem:[%s1] sm:$0x1]
        %v590 = vld [vmem:[%s2] sm:$0x1]
        %vm591 = vcmask 261120
        %v592 = vsel %vm591, %v588, 0.0
        %593 = vadd.xlane.f32.xlu0 %v592
        %v594 = vpop.xlane.xlu0 %593
        %v595 = vrcp.pop 32.0
        %v596 = vmul.f32 32.0, %v595
        %v597 = vsub.f32 1.0, %v596
        %v598 = vmul.f32 %v595, %v597
        %v599 = vadd.f32 %v595, %v598
        %vm600 = vweird.f32 %v595
        %v601 = vsel %vm600, %v595, %v599
        %v602 = vmul.f32 %v594, %v601
        %v603 = vsub.f32 %v588, %v602
        %v604 = vmul.f32 %v603, %v603
        %v605 = vsel %vm591, %v604, 0.0
        %606 = vadd.xlane.f32.xlu0 %v605
        %v607 = vpop.xlane.xlu0 %606
        %v608 = vmul.f32 %v607, %v601
        %v609 = vadd.f32 %v608, 1e-06
        %v610 = vrsqrt.pop %v609
        %v611 = vmul.f32 %v610, %v609
        %v612 = vmul.f32 %v611, %v610
        %v613 = vmul.f32 0.5, %v612
        %v614 = vsub.f32 1.5, %v613
        %v615 = vmul.f32 %v610, %v614
        %vm616 = vweird.f32 %v609
        %vm617 = vweird.f32 %v610
        %vm618 = vmor %vm616, %vm617
        %v619 = vsel %vm618, %v610, %v615
        %v620 = vmul.f32 %v603, %v619
        %v622 = vperm.slane %v589, 0
        %v624 = vmul.f32 %v620, %v622
        %v626 = vperm.slane %v590, 0
        %v628 = vadd.f32 %v624, %v626
        %v629 = vld [vmem:[%s3] sm:$0xf]
        %v630 = vld [vmem:[%s3 + $0x4] sm:$0xf]
        %v631 = vld [vmem:[%s3 + $0x8] sm:$0xf]
        %v632 = vld [vmem:[%s3 + $0xc] sm:$0xf]
        %v633 = vld [vmem:[%s4] sm:$0x1]
        %v634 = vpack.c.bf16 %v628, %v628
        %v636 = vperm.slane %v633, 0
        %v642 = vunpack.c.l.b16 %v629
        %v643 = vunpack.c.l.b16 %v630
        %v644 = vunpack.c.l.b16 %v631
        %v645 = vunpack.c.l.b16 %v632
        %v646 = vpack.c.b16 %v643, %v642
        %v647 = vpack.c.b16 %v645, %v644
        %v651 = vsel %vm591, %v634, 0
        %653 = vmatpush.bf16.msra.mxu0 0
        %654 = vmatpush.bf16.msra.mxu0 0
        %655 = vmatpush.bf16.msra.mxu0 0
        %656 = vmatpush.bf16.msra.mxu0 0
        %657 = vmatpush.bf16.msra.mxu0 0
        %658 = vmatpush.bf16.msra.mxu0 0
        %659 = vmatpush.bf16.msra.mxu0 %v647
        %660 = vmatpush.bf16.msra.mxu0 %v646
        %661 = vmatmul.bf16.gmra.mxu0 %v651
        %v662 = vpop.f32.mrf.mxu0
        %v663 = vadd.f32 %v636, %v662
        %v664 = vpop.f32.mrf.mxu0
        %665 = vdwg.mxu0
        %vm666 = vcmask 785408
        %667 = vst.msk [vmem:[#allocation2] sm:$0xff] %vm666, %v663
        %v668 = vld [vmem:[#allocation2] sm:$0xff]
        %v669 = vmul.f32 %v668, 0.25
        %v670 = vpack.c.bf16 %v669, %v669
        %v671 = vpack.c.bf16 %v668, %v668
        %673 = vrot.lane.b32.xlu0 %v671, 96
        %v674 = vpop.permute.xlu0 %673
        %vm675 = vcmask 130048
        %v677 = vsel %vm675, %v670, 0
        %v680 = vsel %vm675, %v674, 0
        %682 = vmatpush.bf16.xpose.msra.mxu0 0
        %683 = vmatpush.bf16.xpose.msra.mxu0 0
        %684 = vmatpush.bf16.xpose.msra.mxu0 0
        %685 = vmatpush.bf16.xpose.msra.mxu0 0
        %686 = vmatpush.bf16.xpose.msra.mxu0 0
        %687 = vmatpush.bf16.xpose.msra.mxu0 0
        %688 = vmatpush.bf16.xpose.msra.mxu0 0
        %689 = vmatpush.bf16.xpose.msra.mxu0 %v680
        %690 = vmatmul.bf16.gmra.mxu0 %v677
        %v691 = vpop.f32.mrf.mxu0
        %v692 = vadd.f32 0.0, %v691
        %v693 = vpop.f32.mrf.mxu0
        %694 = vdwg.mxu0
        %v695 = vsel %vm587, %v692, -1e+09
        %vm696 = vcmask 64512
        %v697 = vsel %vm696, %v695, -inf
        %698 = vmax.xlane.f32.xlu0 %v697
        %v699 = vpop.xlane.xlu0 %698
        %v700 = vsub.f32 %v695, %v699
        %v701 = vmul.f32 %v700, 1.442695
        %v702 = vpow.pop %v701
        %v703 = vsel %vm696, %v702, 0.0
        %704 = vadd.xlane.f32.xlu0 %v703
        %v705 = vpop.xlane.xlu0 %704
        %v706 = vrcp.pop %v705
        %v707 = vmul.f32 %v702, %v706
        %v708 = vpack.c.bf16 %v707, %v707
        %709 = vrot.lane.b32.xlu0 %v671, 64
        %v710 = vpop.permute.xlu0 %709
        %v712 = vsel %vm696, %v708, 0
        %vm714 = vcmask 1043456
        %v716 = vsel %vm714, %v710, 0
        %718 = vmatpush.bf16.msra.mxu0 0
        %719 = vmatpush.bf16.msra.mxu0 0
        %720 = vmatpush.bf16.msra.mxu0 0
        %721 = vmatpush.bf16.msra.mxu0 0
        %722 = vmatpush.bf16.msra.mxu0 0
        %723 = vmatpush.bf16.msra.mxu0 0
        %724 = vmatpush.bf16.msra.mxu0 0
        %725 = vmatpush.bf16.msra.mxu0 %v716
        %726 = vmatmul.bf16.gmra.mxu0 %v712
        %v727 = vpop.f32.mrf.mxu0
        %v728 = vadd.f32 0.0, %v727
        %v729 = vpop.f32.mrf.mxu0
        %730 = vdwg.mxu0
        %731 = vst.msk [vmem:[#allocation3] sm:$0xff] %vm675, %v728
        %v732 = vld [vmem:[#allocation2] sm:$0xff]
        %v733 = vmul.f32 %v732, 0.25
        %v734 = vpack.c.bf16 %v733, %v733
        %v735 = vpack.c.bf16 %v732, %v732
        %737 = vrot.lane.b32.xlu0 %v734, 112
        %v738 = vpop.permute.xlu0 %737
        %740 = vrot.lane.b32.xlu0 %v735, 80
        %v741 = vpop.permute.xlu0 %740
        %v743 = vsel %vm675, %v738, 0
        %v746 = vsel %vm675, %v741, 0
        %748 = vmatpush.bf16.xpose.msra.mxu0 0
        %749 = vmatpush.bf16.xpose.msra.mxu0 0
        %750 = vmatpush.bf16.xpose.msra.mxu0 0
        %751 = vmatpush.bf16.xpose.msra.mxu0 0
        %752 = vmatpush.bf16.xpose.msra.mxu0 0
        %753 = vmatpush.bf16.xpose.msra.mxu0 0
        %754 = vmatpush.bf16.xpose.msra.mxu0 0
        %755 = vmatpush.bf16.xpose.msra.mxu0 %v746
        %756 = vmatmul.bf16.gmra.mxu0 %v743
        %v757 = vpop.f32.mrf.mxu0
        %v758 = vadd.f32 0.0, %v757
        %v759 = vpop.f32.mrf.mxu0
        %760 = vdwg.mxu0
        %v761 = vsel %vm587, %v758, -1e+09
        %v762 = vsel %vm696, %v761, -inf
        %763 = vmax.xlane.f32.xlu0 %v762
        %v764 = vpop.xlane.xlu0 %763
        %v765 = vsub.f32 %v761, %v764
        %v766 = vmul.f32 %v765, 1.442695
        %v767 = vpow.pop %v766
        %v768 = vsel %vm696, %v767, 0.0
        %769 = vadd.xlane.f32.xlu0 %v768
        %v770 = vpop.xlane.xlu0 %769
        %v771 = vrcp.pop %v770
        %v772 = vmul.f32 %v767, %v771
        %v773 = vpack.c.bf16 %v772, %v772
        %774 = vrot.lane.b32.xlu0 %v735, 48
        %v775 = vpop.permute.xlu0 %774
        %v777 = vsel %vm696, %v773, 0
        %v780 = vsel %vm714, %v775, 0
        %782 = vmatpush.bf16.msra.mxu0 0
        %783 = vmatpush.bf16.msra.mxu0 0
        %784 = vmatpush.bf16.msra.mxu0 0
        %785 = vmatpush.bf16.msra.mxu0 0
        %786 = vmatpush.bf16.msra.mxu0 0
        %787 = vmatpush.bf16.msra.mxu0 0
        %788 = vmatpush.bf16.msra.mxu0 0
        %789 = vmatpush.bf16.msra.mxu0 %v780
        %790 = vmatmul.bf16.gmra.mxu0 %v777
        %v791 = vpop.f32.mrf.mxu0
        %v792 = vadd.f32 0.0, %v791
        %v793 = vpop.f32.mrf.mxu0
        %794 = vdwg.mxu0
        %796 = vrot.lane.b32.xlu0 %v792, 16
        %v797 = vpop.permute.xlu0 %796
        %vm799 = vcmask 261248
        %800 = vst.msk [vmem:[#allocation3] sm:$0xff] %vm799, %v797
        %v801 = vld [vmem:[#allocation3] sm:$0xff]
        %v802 = vld [vmem:[%s5] sm:$0xf]
        %v803 = vld [vmem:[%s5 + $0x4] sm:$0xf]
        %v804 = vld [vmem:[%s5 + $0x8] sm:$0xf]
        %v805 = vld [vmem:[%s5 + $0xc] sm:$0xf]
        %v806 = vld [vmem:[%s6] sm:$0x1]
        %v807 = vpack.c.bf16 %v801, %v801
        %v809 = vperm.slane %v806, 0
        %v815 = vunpack.c.l.b16 %v802
        %v816 = vunpack.c.l.b16 %v803
        %v817 = vunpack.c.l.b16 %v804
        %v818 = vunpack.c.l.b16 %v805
        %v819 = vpack.c.b16 %v816, %v815
        %v820 = vpack.c.b16 %v818, %v817
        %v824 = vsel %vm591, %v807, 0
        %826 = vmatpush.bf16.msra.mxu0 0
        %827 = vmatpush.bf16.msra.mxu0 0
        %828 = vmatpush.bf16.msra.mxu0 0
        %829 = vmatpush.bf16.msra.mxu0 0
        %830 = vmatpush.bf16.msra.mxu0 0
        %831 = vmatpush.bf16.msra.mxu0 0
        %832 = vmatpush.bf16.msra.mxu0 %v820
        %833 = vmatpush.bf16.msra.mxu0 %v819
        %834 = vmatmul.bf16.gmra.mxu0 %v824
        %v835 = vpop.f32.mrf.mxu0
        %v836 = vadd.f32 %v809, %v835
        %v837 = vpop.f32.mrf.mxu0
        %838 = vdwg.mxu0
        %v839 = vadd.f32 %v836, %v628
        %v840 = vld [vmem:[%s7] sm:$0x1]
        %v841 = vld [vmem:[%s8] sm:$0x1]
        %v842 = vsel %vm591, %v839, 0.0
        %843 = vadd.xlane.f32.xlu0 %v842
        %v844 = vpop.xlane.xlu0 %843
        %v845 = vmul.f32 %v844, %v601
        %v846 = vsub.f32 %v839, %v845
        %v847 = vmul.f32 %v846, %v846
        %v848 = vsel %vm591, %v847, 0.0
        %849 = vadd.xlane.f32.xlu0 %v848
        %v850 = vpop.xlane.xlu0 %849
        %v851 = vmul.f32 %v850, %v601
        %v852 = vadd.f32 %v851, 1e-06
        %v853 = vrsqrt.pop %v852
        %v854 = vmul.f32 %v853, %v852
        %v855 = vmul.f32 %v854, %v853
        %v856 = vmul.f32 0.5, %v855
        %v857 = vsub.f32 1.5, %v856
        %v858 = vmul.f32 %v853, %v857
        %vm859 = vweird.f32 %v852
        %vm860 = vweird.f32 %v853
        %vm861 = vmor %vm859, %vm860
        %v862 = vsel %vm861, %v853, %v858
        %v863 = vmul.f32 %v846, %v862
        %v865 = vperm.slane %v840, 0
        %v867 = vmul.f32 %v863, %v865
        %v869 = vperm.slane %v841, 0
        %v871 = vadd.f32 %v867, %v869
        %v872 = vld [vmem:[%s9] sm:$0xf]
        %v873 = vld [vmem:[%s9 + $0x4] sm:$0xf]
        %v874 = vld [vmem:[%s9 + $0x8] sm:$0xf]
        %v875 = vld [vmem:[%s9 + $0xc] sm:$0xf]
        %v876 = vld [vmem:[%s10] sm:$0x1]
        %v877 = vpack.c.bf16 %v871, %v871
        %v879 = vperm.slane %v876, 0
        %v885 = vunpack.c.l.b16 %v872
        %v886 = vunpack.c.l.b16 %v873
        %v887 = vunpack.c.l.b16 %v874
        %v888 = vunpack.c.l.b16 %v875
        %v889 = vpack.c.b16 %v886, %v885
        %v890 = vpack.c.b16 %v888, %v887
        %v894 = vsel %vm591, %v877, 0
        %896 = vmatpush.bf16.msra.mxu0 0
        %897 = vmatpush.bf16.msra.mxu0 0
        %898 = vmatpush.bf16.msra.mxu0 0
        %899 = vmatpush.bf16.msra.mxu0 0
        %900 = vmatpush.bf16.msra.mxu0 0
        %901 = vmatpush.bf16.msra.mxu0 0
        %902 = vmatpush.bf16.msra.mxu0 %v890
        %903 = vmatpush.bf16.msra.mxu0 %v889
        %904 = vmatmul.bf16.gmra.mxu0 %v894
        %v905 = vpop.f32.mrf.mxu0
        %v906 = vadd.f32 %v879, %v905
        %v907 = vpop.f32.mrf.mxu0
        %908 = vdwg.mxu0
        %v909 = vmax.f32 %v906, 0.0
        %v910 = vld [vmem:[%s11] sm:$0xf]
        %v911 = vld [vmem:[%s11 + $0x4] sm:$0xf]
        %v912 = vld [vmem:[%s11 + $0x8] sm:$0xf]
        %v913 = vld [vmem:[%s11 + $0xc] sm:$0xf]
        %v914 = vld [vmem:[%s11 + $0x10] sm:$0xf]
        %v915 = vld [vmem:[%s11 + $0x14] sm:$0xf]
        %v916 = vld [vmem:[%s11 + $0x18] sm:$0xf]
        %v917 = vld [vmem:[%s11 + $0x1c] sm:$0xf]
        %v918 = vld [vmem:[%s12] sm:$0x1]
        %v919 = vpack.c.bf16 %v909, %v909
        %v921 = vperm.slane %v918, 0
        %v931 = vunpack.c.l.b16 %v910
        %v932 = vunpack.c.l.b16 %v911
        %v933 = vunpack.c.l.b16 %v912
        %v934 = vunpack.c.l.b16 %v913
        %v935 = vunpack.c.l.b16 %v914
        %v936 = vunpack.c.l.b16 %v915
        %v937 = vunpack.c.l.b16 %v916
        %v938 = vunpack.c.l.b16 %v917
        %v939 = vpack.c.b16 %v932, %v931
        %v940 = vpack.c.b16 %v934, %v933
        %v941 = vpack.c.b16 %v936, %v935
        %v942 = vpack.c.b16 %v938, %v937
        %vm947 = vcmask 523264
        %v949 = vsel %vm947, %v919, 0
        %951 = vmatpush.bf16.msra.mxu0 0
        %952 = vmatpush.bf16.msra.mxu0 0
        %953 = vmatpush.bf16.msra.mxu0 0
        %954 = vmatpush.bf16.msra.mxu0 0
        %955 = vmatpush.bf16.msra.mxu0 %v942
        %956 = vmatpush.bf16.msra.mxu0 %v941
        %957 = vmatpush.bf16.msra.mxu0 %v940
        %958 = vmatpush.bf16.msra.mxu0 %v939
        %959 = vmatmul.bf16.gmra.mxu0 %v949
        %v960 = vpop.f32.mrf.mxu0
        %v961 = vadd.f32 %v921, %v960
        %v962 = vpop.f32.mrf.mxu0
        %963 = vdwg.mxu0
        %v964 = vadd.f32 %v961, %v871
        %v965 = vld [vmem:[%s13] sm:$0x1]
        %v966 = vld [vmem:[%s14] sm:$0x1]
        %v967 = vsel %vm591, %v964, 0.0
        %968 = vadd.xlane.f32.xlu0 %v967
        %v969 = vpop.xlane.xlu0 %968
        %v970 = vmul.f32 %v969, %v601
        %v971 = vsub.f32 %v964, %v970
        %v972 = vmul.f32 %v971, %v971
        %v973 = vsel %vm591, %v972, 0.0
        %974 = vadd.xlane.f32.xlu0 %v973
        %v975 = vpop.xlane.xlu0 %974
        %v976 = vmul.f32 %v975, %v601
        %v977 = vadd.f32 %v976, 1e-06
        %v978 = vrsqrt.pop %v977
        %v979 = vmul.f32 %v978, %v977
        %v980 = vmul.f32 %v979, %v978
        %v981 = vmul.f32 0.5, %v980
        %v982 = vsub.f32 1.5, %v981
        %v983 = vmul.f32 %v978, %v982
        %vm984 = vweird.f32 %v977
        %vm985 = vweird.f32 %v978
        %vm986 = vmor %vm984, %vm985
        %v987 = vsel %vm986, %v978, %v983
        %v988 = vmul.f32 %v971, %v987
        %v990 = vperm.slane %v965, 0
        %v992 = vmul.f32 %v988, %v990
        %v994 = vperm.slane %v966, 0
        %v996 = vadd.f32 %v992, %v994
        %s997 = scalar_lea.vmem %s3, 16
        %v998 = vld [vmem:[%s997] sm:$0xf]
        %v999 = vld [vmem:[%s997 + $0x4] sm:$0xf]
        %v1000 = vld [vmem:[%s997 + $0x8] sm:$0xf]
        %v1001 = vld [vmem:[%s997 + $0xc] sm:$0xf]
        %s1002 = scalar_lea.vmem %s4, 1
        %v1003 = vld [vmem:[%s1002] sm:$0x1]
        %v1004 = vpack.c.bf16 %v996, %v996
        %v1006 = vperm.slane %v1003, 0
        %v1012 = vunpack.c.l.b16 %v998
        %v1013 = vunpack.c.l.b16 %v999
        %v1014 = vunpack.c.l.b16 %v1000
        %v1015 = vunpack.c.l.b16 %v1001
        %v1016 = vpack.c.b16 %v1013, %v1012
        %v1017 = vpack.c.b16 %v1015, %v1014
        %v1021 = vsel %vm591, %v1004, 0
        %1023 = vmatpush.bf16.msra.mxu0 0
        %1024 = vmatpush.bf16.msra.mxu0 0
        %1025 = vmatpush.bf16.msra.mxu0 0
        %1026 = vmatpush.bf16.msra.mxu0 0
        %1027 = vmatpush.bf16.msra.mxu0 0
        %1028 = vmatpush.bf16.msra.mxu0 0
        %1029 = vmatpush.bf16.msra.mxu0 %v1017
        %1030 = vmatpush.bf16.msra.mxu0 %v1016
        %1031 = vmatmul.bf16.gmra.mxu0 %v1021
        %v1032 = vpop.f32.mrf.mxu0
        %v1033 = vadd.f32 %v1006, %v1032
        %v1034 = vpop.f32.mrf.mxu0
        %1035 = vdwg.mxu0
        %1036 = vst.msk [vmem:[#allocation2] sm:$0xff] %vm666, %v1033
        %v1037 = vld [vmem:[#allocation2] sm:$0xff]
        %v1038 = vmul.f32 %v1037, 0.25
        %v1039 = vpack.c.bf16 %v1038, %v1038
        %v1040 = vpack.c.bf16 %v1037, %v1037
        %1042 = vrot.lane.b32.xlu0 %v1040, 96
        %v1043 = vpop.permute.xlu0 %1042
        %v1045 = vsel %vm675, %v1039, 0
        %v1048 = vsel %vm675, %v1043, 0
        %1050 = vmatpush.bf16.xpose.msra.mxu0 0
        %1051 = vmatpush.bf16.xpose.msra.mxu0 0
        %1052 = vmatpush.bf16.xpose.msra.mxu0 0
        %1053 = vmatpush.bf16.xpose.msra.mxu0 0
        %1054 = vmatpush.bf16.xpose.msra.mxu0 0
        %1055 = vmatpush.bf16.xpose.msra.mxu0 0
        %1056 = vmatpush.bf16.xpose.msra.mxu0 0
        %1057 = vmatpush.bf16.xpose.msra.mxu0 %v1048
        %1058 = vmatmul.bf16.gmra.mxu0 %v1045
        %v1059 = vpop.f32.mrf.mxu0
        %v1060 = vadd.f32 0.0, %v1059
        %v1061 = vpop.f32.mrf.mxu0
        %1062 = vdwg.mxu0
        %v1063 = vsel %vm587, %v1060, -1e+09
        %v1064 = vsel %vm696, %v1063, -inf
        %1065 = vmax.xlane.f32.xlu0 %v1064
        %v1066 = vpop.xlane.xlu0 %1065
        %v1067 = vsub.f32 %v1063, %v1066
        %v1068 = vmul.f32 %v1067, 1.442695
        %v1069 = vpow.pop %v1068
        %v1070 = vsel %vm696, %v1069, 0.0
        %1071 = vadd.xlane.f32.xlu0 %v1070
        %v1072 = vpop.xlane.xlu0 %1071
        %v1073 = vrcp.pop %v1072
        %v1074 = vmul.f32 %v1069, %v1073
        %v1075 = vpack.c.bf16 %v1074, %v1074
        %1076 = vrot.lane.b32.xlu0 %v1040, 64
        %v1077 = vpop.permute.xlu0 %1076
        %v1079 = vsel %vm696, %v1075, 0
        %v1082 = vsel %vm714, %v1077, 0
        %1084 = vmatpush.bf16.msra.mxu0 0
        %1085 = vmatpush.bf16.msra.mxu0 0
        %1086 = vmatpush.bf16.msra.mxu0 0
        %1087 = vmatpush.bf16.msra.mxu0 0
        %1088 = vmatpush.bf16.msra.mxu0 0
        %1089 = vmatpush.bf16.msra.mxu0 0
        %1090 = vmatpush.bf16.msra.mxu0 0
        %1091 = vmatpush.bf16.msra.mxu0 %v1082
        %1092 = vmatmul.bf16.gmra.mxu0 %v1079
        %v1093 = vpop.f32.mrf.mxu0
        %v1094 = vadd.f32 0.0, %v1093
        %v1095 = vpop.f32.mrf.mxu0
        %1096 = vdwg.mxu0
        %1097 = vst.msk [vmem:[#allocation3] sm:$0xff] %vm675, %v1094
        %1098 = vst.msk [vmem:[%s577] sm:$0xff] %vm696, %v1074
        %v1099 = vld [vmem:[#allocation2] sm:$0xff]
        %v1100 = vmul.f32 %v1099, 0.25
        %v1101 = vpack.c.bf16 %v1100, %v1100
        %v1102 = vpack.c.bf16 %v1099, %v1099
        %1104 = vrot.lane.b32.xlu0 %v1101, 112
        %v1105 = vpop.permute.xlu0 %1104
        %1107 = vrot.lane.b32.xlu0 %v1102, 80
        %v1108 = vpop.permute.xlu0 %1107
        %v1110 = vsel %vm675, %v1105, 0
        %v1113 = vsel %vm675, %v1108, 0
        %1115 = vmatpush.bf16.xpose.msra.mxu0 0
        %1116 = vmatpush.bf16.xpose.msra.mxu0 0
        %1117 = vmatpush.bf16.xpose.msra.mxu0 0
        %1118 = vmatpush.bf16.xpose.msra.mxu0 0
        %1119 = vmatpush.bf16.xpose.msra.mxu0 0
        %1120 = vmatpush.bf16.xpose.msra.mxu0 0
        %1121 = vmatpush.bf16.xpose.msra.mxu0 0
        %1122 = vmatpush.bf16.xpose.msra.mxu0 %v1113
        %1123 = vmatmul.bf16.gmra.mxu0 %v1110
        %v1124 = vpop.f32.mrf.mxu0
        %v1125 = vadd.f32 0.0, %v1124
        %v1126 = vpop.f32.mrf.mxu0
        %1127 = vdwg.mxu0
        %v1128 = vsel %vm587, %v1125, -1e+09
        %v1129 = vsel %vm696, %v1128, -inf
        %1130 = vmax.xlane.f32.xlu0 %v1129
        %v1131 = vpop.xlane.xlu0 %1130
        %v1132 = vsub.f32 %v1128, %v1131
        %v1133 = vmul.f32 %v1132, 1.442695
        %v1134 = vpow.pop %v1133
        %v1135 = vsel %vm696, %v1134, 0.0
        %1136 = vadd.xlane.f32.xlu0 %v1135
        %v1137 = vpop.xlane.xlu0 %1136
        %v1138 = vrcp.pop %v1137
        %v1139 = vmul.f32 %v1134, %v1138
        %v1140 = vpack.c.bf16 %v1139, %v1139
        %1141 = vrot.lane.b32.xlu0 %v1102, 48
        %v1142 = vpop.permute.xlu0 %1141
        %v1144 = vsel %vm696, %v1140, 0
        %v1147 = vsel %vm714, %v1142, 0
        %1149 = vmatpush.bf16.msra.mxu0 0
        %1150 = vmatpush.bf16.msra.mxu0 0
        %1151 = vmatpush.bf16.msra.mxu0 0
        %1152 = vmatpush.bf16.msra.mxu0 0
        %1153 = vmatpush.bf16.msra.mxu0 0
        %1154 = vmatpush.bf16.msra.mxu0 0
        %1155 = vmatpush.bf16.msra.mxu0 0
        %1156 = vmatpush.bf16.msra.mxu0 %v1147
        %1157 = vmatmul.bf16.gmra.mxu0 %v1144
        %v1158 = vpop.f32.mrf.mxu0
        %v1159 = vadd.f32 0.0, %v1158
        %v1160 = vpop.f32.mrf.mxu0
        %1161 = vdwg.mxu0
        %1163 = vrot.lane.b32.xlu0 %v1159, 16
        %v1164 = vpop.permute.xlu0 %1163
        %1166 = vst.msk [vmem:[#allocation3] sm:$0xff] %vm799, %v1164
        %s1167 = scalar_lea.vmem %s577, 8 [#allocation6]
        %1168 = vst.msk [vmem:[%s1167] sm:$0xff] %vm696, %v1139
        %v1169 = vld [vmem:[#allocation3] sm:$0xff]
        %s1170 = scalar_lea.vmem %s5, 16
        %v1171 = vld [vmem:[%s1170] sm:$0xf]
        %v1172 = vld [vmem:[%s1170 + $0x4] sm:$0xf]
        %v1173 = vld [vmem:[%s1170 + $0x8] sm:$0xf]
        %v1174 = vld [vmem:[%s1170 + $0xc] sm:$0xf]
        %s1175 = scalar_lea.vmem %s6, 1
        %v1176 = vld [vmem:[%s1175] sm:$0x1]
        %v1177 = vpack.c.bf16 %v1169, %v1169
        %v1179 = vperm.slane %v1176, 0
        %v1185 = vunpack.c.l.b16 %v1171
        %v1186 = vunpack.c.l.b16 %v1172
        %v1187 = vunpack.c.l.b16 %v1173
        %v1188 = vunpack.c.l.b16 %v1174
        %v1189 = vpack.c.b16 %v1186, %v1185
        %v1190 = vpack.c.b16 %v1188, %v1187
        %v1194 = vsel %vm591, %v1177, 0
        %1196 = vmatpush.bf16.msra.mxu0 0
        %1197 = vmatpush.bf16.msra.mxu0 0
        %1198 = vmatpush.bf16.msra.mxu0 0
        %1199 = vmatpush.bf16.msra.mxu0 0
        %1200 = vmatpush.bf16.msra.mxu0 0
        %1201 = vmatpush.bf16.msra.mxu0 0
        %1202 = vmatpush.bf16.msra.mxu0 %v1190
        %1203 = vmatpush.bf16.msra.mxu0 %v1189
        %1204 = vmatmul.bf16.gmra.mxu0 %v1194
        %v1205 = vpop.f32.mrf.mxu0
        %v1206 = vadd.f32 %v1179, %v1205
        %v1207 = vpop.f32.mrf.mxu0
        %1208 = vdwg.mxu0
        %v1209 = vadd.f32 %v1206, %v996
        %s1210 = scalar_lea.vmem %s7, 1
        %v1211 = vld [vmem:[%s1210] sm:$0x1]
        %s1212 = scalar_lea.vmem %s8, 1
        %v1213 = vld [vmem:[%s1212] sm:$0x1]
        %v1214 = vsel %vm591, %v1209, 0.0
        %1215 = vadd.xlane.f32.xlu0 %v1214
        %v1216 = vpop.xlane.xlu0 %1215
        %v1217 = vmul.f32 %v1216, %v601
        %v1218 = vsub.f32 %v1209, %v1217
        %v1219 = vmul.f32 %v1218, %v1218
        %v1220 = vsel %vm591, %v1219, 0.0
        %1221 = vadd.xlane.f32.xlu0 %v1220
        %v1222 = vpop.xlane.xlu0 %1221
        %v1223 = vmul.f32 %v1222, %v601
        %v1224 = vadd.f32 %v1223, 1e-06
        %v1225 = vrsqrt.pop %v1224
        %v1226 = vmul.f32 %v1225, %v1224
        %v1227 = vmul.f32 %v1226, %v1225
        %v1228 = vmul.f32 0.5, %v1227
        %v1229 = vsub.f32 1.5, %v1228
        %v1230 = vmul.f32 %v1225, %v1229
        %vm1231 = vweird.f32 %v1224
        %vm1232 = vweird.f32 %v1225
        %vm1233 = vmor %vm1231, %vm1232
        %v1234 = vsel %vm1233, %v1225, %v1230
        %v1235 = vmul.f32 %v1218, %v1234
        %v1237 = vperm.slane %v1211, 0
        %v1239 = vmul.f32 %v1235, %v1237
        %v1241 = vperm.slane %v1213, 0
        %v1243 = vadd.f32 %v1239, %v1241
        %s1244 = scalar_lea.vmem %s9, 16
        %v1245 = vld [vmem:[%s1244] sm:$0xf]
        %v1246 = vld [vmem:[%s1244 + $0x4] sm:$0xf]
        %v1247 = vld [vmem:[%s1244 + $0x8] sm:$0xf]
        %v1248 = vld [vmem:[%s1244 + $0xc] sm:$0xf]
        %s1249 = scalar_lea.vmem %s10, 1
        %v1250 = vld [vmem:[%s1249] sm:$0x1]
        %v1251 = vpack.c.bf16 %v1243, %v1243
        %v1253 = vperm.slane %v1250, 0
        %v1259 = vunpack.c.l.b16 %v1245
        %v1260 = vunpack.c.l.b16 %v1246
        %v1261 = vunpack.c.l.b16 %v1247
        %v1262 = vunpack.c.l.b16 %v1248
        %v1263 = vpack.c.b16 %v1260, %v1259
        %v1264 = vpack.c.b16 %v1262, %v1261
        %v1268 = vsel %vm591, %v1251, 0
        %1270 = vmatpush.bf16.msra.mxu0 0
        %1271 = vmatpush.bf16.msra.mxu0 0
        %1272 = vmatpush.bf16.msra.mxu0 0
        %1273 = vmatpush.bf16.msra.mxu0 0
        %1274 = vmatpush.bf16.msra.mxu0 0
        %1275 = vmatpush.bf16.msra.mxu0 0
        %1276 = vmatpush.bf16.msra.mxu0 %v1264
        %1277 = vmatpush.bf16.msra.mxu0 %v1263
        %1278 = vmatmul.bf16.gmra.mxu0 %v1268
        %v1279 = vpop.f32.mrf.mxu0
        %v1280 = vadd.f32 %v1253, %v1279
        %v1281 = vpop.f32.mrf.mxu0
        %1282 = vdwg.mxu0
        %v1283 = vmax.f32 %v1280, 0.0
        %s1284 = scalar_lea.vmem %s11, 32
        %v1285 = vld [vmem:[%s1284] sm:$0xf]
        %v1286 = vld [vmem:[%s1284 + $0x4] sm:$0xf]
        %v1287 = vld [vmem:[%s1284 + $0x8] sm:$0xf]
        %v1288 = vld [vmem:[%s1284 + $0xc] sm:$0xf]
        %v1289 = vld [vmem:[%s1284 + $0x10] sm:$0xf]
        %v1290 = vld [vmem:[%s1284 + $0x14] sm:$0xf]
        %v1291 = vld [vmem:[%s1284 + $0x18] sm:$0xf]
        %v1292 = vld [vmem:[%s1284 + $0x1c] sm:$0xf]
        %s1293 = scalar_lea.vmem %s12, 1
        %v1294 = vld [vmem:[%s1293] sm:$0x1]
        %v1295 = vpack.c.bf16 %v1283, %v1283
        %v1297 = vperm.slane %v1294, 0
        %v1307 = vunpack.c.l.b16 %v1285
        %v1308 = vunpack.c.l.b16 %v1286
        %v1309 = vunpack.c.l.b16 %v1287
        %v1310 = vunpack.c.l.b16 %v1288
        %v1311 = vunpack.c.l.b16 %v1289
        %v1312 = vunpack.c.l.b16 %v1290
        %v1313 = vunpack.c.l.b16 %v1291
        %v1314 = vunpack.c.l.b16 %v1292
        %v1315 = vpack.c.b16 %v1308, %v1307
        %v1316 = vpack.c.b16 %v1310, %v1309
        %v1317 = vpack.c.b16 %v1312, %v1311
        %v1318 = vpack.c.b16 %v1314, %v1313
        %v1324 = vsel %vm947, %v1295, 0
        %1326 = vmatpush.bf16.msra.mxu0 0
        %1327 = vmatpush.bf16.msra.mxu0 0
        %1328 = vmatpush.bf16.msra.mxu0 0
        %1329 = vmatpush.bf16.msra.mxu0 0
        %1330 = vmatpush.bf16.msra.mxu0 %v1318
        %1331 = vmatpush.bf16.msra.mxu0 %v1317
        %1332 = vmatpush.bf16.msra.mxu0 %v1316
        %1333 = vmatpush.bf16.msra.mxu0 %v1315
        %1334 = vmatmul.bf16.gmra.mxu0 %v1324
        %v1335 = vpop.f32.mrf.mxu0
        %v1336 = vadd.f32 %v1297, %v1335
        %v1337 = vpop.f32.mrf.mxu0
        %1338 = vdwg.mxu0
        %v1339 = vadd.f32 %v1336, %v1243
        %s1340 = scalar_lea.vmem %s13, 1
        %v1341 = vld [vmem:[%s1340] sm:$0x1]
        %s1342 = scalar_lea.vmem %s14, 1
        %v1343 = vld [vmem:[%s1342] sm:$0x1]
        %v1344 = vsel %vm591, %v1339, 0.0
        %1345 = vadd.xlane.f32.xlu0 %v1344
        %v1346 = vpop.xlane.xlu0 %1345
        %v1347 = vmul.f32 %v1346, %v601
        %v1348 = vsub.f32 %v1339, %v1347
        %v1349 = vmul.f32 %v1348, %v1348
        %v1350 = vsel %vm591, %v1349, 0.0
        %1351 = vadd.xlane.f32.xlu0 %v1350
        %v1352 = vpop.xlane.xlu0 %1351
        %v1353 = vmul.f32 %v1352, %v601
        %v1354 = vadd.f32 %v1353, 1e-06
        %v1355 = vrsqrt.pop %v1354
        %v1356 = vmul.f32 %v1355, %v1354
        %v1357 = vmul.f32 %v1356, %v1355
        %v1358 = vmul.f32 0.5, %v1357
        %v1359 = vsub.f32 1.5, %v1358
        %v1360 = vmul.f32 %v1355, %v1359
        %vm1361 = vweird.f32 %v1354
        %vm1362 = vweird.f32 %v1355
        %vm1363 = vmor %vm1361, %vm1362
        %v1364 = vsel %vm1363, %v1355, %v1360
        %v1365 = vmul.f32 %v1348, %v1364
        %v1367 = vperm.slane %v1341, 0
        %v1369 = vmul.f32 %v1365, %v1367
        %v1371 = vperm.slane %v1343, 0
        %v1373 = vadd.f32 %v1369, %v1371
        %v1374 = vld [vmem:[%s15] sm:$0xf]
        %v1375 = vld [vmem:[%s15 + $0x4] sm:$0xf]
        %v1376 = vld [vmem:[%s15 + $0x8] sm:$0xf]
        %v1377 = vld [vmem:[%s15 + $0xc] sm:$0xf]
        %v1378 = vld [vmem:[%s16] sm:$0x1]
        %v1379 = vpack.c.bf16 %v1373, %v1373
        %v1381 = vperm.slane %v1378, 0
        %v1387 = vunpack.c.l.b16 %v1374
        %v1388 = vunpack.c.l.b16 %v1375
        %v1389 = vunpack.c.l.b16 %v1376
        %v1390 = vunpack.c.l.b16 %v1377
        %v1391 = vpack.c.b16 %v1388, %v1387
        %v1392 = vpack.c.b16 %v1390, %v1389
        %v1396 = vsel %vm591, %v1379, 0
        %1398 = vmatpush.bf16.msra.mxu0 0
        %1399 = vmatpush.bf16.msra.mxu0 0
        %1400 = vmatpush.bf16.msra.mxu0 0
        %1401 = vmatpush.bf16.msra.mxu0 0
        %1402 = vmatpush.bf16.msra.mxu0 0
        %1403 = vmatpush.bf16.msra.mxu0 0
        %1404 = vmatpush.bf16.msra.mxu0 %v1392
        %1405 = vmatpush.bf16.msra.mxu0 %v1391
        %1406 = vmatmul.bf16.gmra.mxu0 %v1396
        %v1407 = vpop.f32.mrf.mxu0
        %v1408 = vadd.f32 %v1381, %v1407
        %v1409 = vpop.f32.mrf.mxu0
        %1410 = vdwg.mxu0
        %1411 = vst.msk [vmem:[%s570] sm:$0xff] %vm947, %v1408
        %s1412 = sand.u32 %s406, 1
        %s1413 = scalar_lea.sflag [#allocation5], %s1412
        %s1414 = sand.u32 %s406, 1
        %s1415 = smul.addr %s1414, 8
        %s1416 = scalar_lea.vmem [#allocation4], %s1415
        %s1417 = sand.u32 %s432, 1
        %s1418 = scalar_lea.sflag [#allocation7], %s1417
        %s1419 = sand.u32 %s432, 1
        %s1420 = smul.addr %s1419, 16
        %s1421 = scalar_lea.vmem [#allocation6], %s1420
        // Predicated region
        $region89: #{transformer_forward.1} parent=87 // pred_check
          %p1422 = pneg %p416
        $region90: #{transformer_forward.1} parent=87 // pred_check_branch
          %1424 = sbr.rel (%p1422) target = $region92
        $region91: #{transformer_forward.1} parent=87 // pred_region
          %1426 = vsyncadd %s1413, 0
          %s1427 = smul.addr %s36, 8
          %s1428 = scalar_lea.hbm %s17, %s1427
          %s1430 = sshll.u32 %s1416, 4
          %s1431 = int_to_ptr.vmem [resolvable:$true] %s1430
          %s1432 = sshll.u32 %s1428, 4
          %s1433 = int_to_ptr.hbm [resolvable:$true] %s1432
          %1435 = dma.vmem_to_hbm [thread:$0]  %s1431, 128, %s1433, %s1413
        $region92: #{transformer_forward.1} parent=87 // pred_fallthru
          _
        // Predicated region
        $region93: #{transformer_forward.1} parent=87 // pred_check
          %p1436 = pneg %p442
        $region94: #{transformer_forward.1} parent=87 // pred_check_branch
          %1438 = sbr.rel (%p1436) target = $region96
        $region95: #{transformer_forward.1} parent=87 // pred_region
          %1440 = vsyncadd %s1418, 0
          %s1441 = smul.addr %s36, 2
          %s1442 = smul.addr %s1441, 8
          %s1443 = scalar_lea.hbm %s18, %s1442
          %s1444 = sshll.u32 %s1421, 4
          %s1445 = int_to_ptr.vmem [resolvable:$true] %s1444
          %s1446 = sshll.u32 %s1443, 4
          %s1447 = int_to_ptr.hbm [resolvable:$true] %s1446
          %1452 = dma.vmem_to_hbm [thread:$0]  %s1445, 256, %s1447, %s1418, 128, 128, 8
        $region96: #{transformer_forward.1} parent=87 // pred_fallthru
          _
      $region88: #{transformer_forward.1} parent=5 // pred_fallthru
        _
      %p1453 = scmp.le.s32.totalorder 2, %s31
      // Predicated region
      $region97: #{transformer_forward.1} parent=5 // pred_check
        %p1454 = pneg %p1453
      $region98: #{transformer_forward.1} parent=5 // pred_check_branch
        %1456 = sbr.rel (%p1454) target = $region100
      $region99: #{transformer_forward.1} parent=5 // pred_region
        %s1457 = ssub.s32 %s31, 2
        // Predicated region
        $region101: #{transformer_forward.1} parent=99 // pred_check
          %p1458 = pneg %p422
        $region102: #{transformer_forward.1} parent=99 // pred_check_branch
          %1460 = sbr.rel (%p1458) target = $region104
        $region103: #{transformer_forward.1} parent=99 // pred_region
          %s1461 = sand.u32 %s407, 1
          %s1462 = scalar_lea.sflag [#allocation5], %s1461
          %s1463 = sand.u32 %s407, 1
          %s1464 = smul.addr %s1463, 8
          %s1465 = scalar_lea.vmem [#allocation4], %s1464
          %1467 = dma.done %s1462, 128
        $region104: #{transformer_forward.1} parent=99 // pred_fallthru
          _
        // Predicated region
        $region105: #{transformer_forward.1} parent=99 // pred_check
          %p1468 = pneg %p448
        $region106: #{transformer_forward.1} parent=99 // pred_check_branch
          %1470 = sbr.rel (%p1468) target = $region108
        $region107: #{transformer_forward.1} parent=99 // pred_region
          %s1471 = sand.u32 %s433, 1
          %s1472 = scalar_lea.sflag [#allocation7], %s1471
          %s1473 = sand.u32 %s433, 1
          %s1474 = smul.addr %s1473, 16
          %s1475 = scalar_lea.vmem [#allocation6], %s1474
          %1477 = dma.done %s1472, 256
        $region108: #{transformer_forward.1} parent=99 // pred_fallthru
          _
      $region100: #{transformer_forward.1} parent=5 // pred_fallthru
        _
    $region6: #{transformer_forward.1} parent=1 // loop_footer
      %s35 = sadd.s32 1, %s31
    $region7: #{transformer_forward.1} parent=1 // loop_footer_branch
      %30 = sbr.rel target = $region3
    $region8: #{transformer_forward.1} parent=1 // loop_exit
      _
    %1478 = vsyncpa [#allocation5], 1
    %s1479 = scalar_lea.sflag [#allocation5], 1
    %1480 = vsyncpa %s1479, 1
    %1481 = vsyncpa [#allocation7], 1
    %s1482 = scalar_lea.sflag [#allocation7], 1
    %1483 = vsyncpa %s1482, 1

</llo_original>
